<compile_context>
chip_gen: v6e
topology: v6e:2x2x1
jax: 0.10.0
libtpu: 0.0.40
codegen_flags: <defaults>
</compile_context>

<pallas_src>
import jax
import jax.numpy as jnp
from jax import lax
from jax.experimental import pallas as pl
from jax.experimental.pallas import tpu as pltpu


# ------------------------------ fused kernel ------------------------------- #

def _make_fused_kernel(N, Cin, H, W, Cout, KH, KW, Hp, Wp, F, LPAD, PAD):
    """Build the fused conv+relu+pool+bn+fc kernel for static shapes."""
    NHW = N * H * W                      # flat (n, i, j) extent per channel
    HW = H * W

    def kernel(x_ref, cw_ref, cp_ref, g_ref, b2_ref, o_ref, pad_ref):
        # ---- Conv2d (VALID), vectorized over Cout.
        # acc[co, n*H*W + i*W + j] accumulates the conv output at position (i,j);
        # the tap (c,kh,kw) reads the input shifted by kh*W+kw, which is a plain
        # lane-offset read of the zero-padded flat input (always lane-dense).
        cw = cw_ref[...]                                     # (Cout, Cin*KH*KW)
        acc = jnp.zeros((Cout, NHW), jnp.float32)
        for kh in range(KH):
            for kw in range(KW):
                shift = kh * W + kw
                slab = x_ref[:, pl.ds(shift, NHW)]           # (Cin, NHW)
                base = (kh * KW + kw) * Cin
                for c in range(Cin):
                    acc = acc + (cw[:, base + c:base + c + 1]     # (Cout,1)
                                 * slab[c:c + 1, :])              # (1, NHW)

        # ---- conv bias + ReLU (cp[:,0] = conv bias).  Positions with i/j >= 14
        # hold finite garbage; they are zero-weighted by the fc matrix below.
        a = jnp.maximum(acc + cp_ref[:, 0:1], 0.0)           # (Cout, NHW)

        # ---- MaxPool2d(2): park `a` in a zero-tailed scratch so the 2x2-window
        # neighbours (+1, +W, +W+1) are plain lane-offset reads; the stride-2
        # even-anchor selection is folded into the fc matmul.
        pad_ref[:, NHW:] = jnp.zeros((Cout, PAD), jnp.float32)
        pad_ref[:, :NHW] = a
        a2 = jnp.maximum(
            jnp.maximum(a, pad_ref[:, pl.ds(1, NHW)]),
            jnp.maximum(pad_ref[:, pl.ds(W, NHW)],
                        pad_ref[:, pl.ds(W + 1, NHW)]))      # (Cout, NHW)

        # ---- (pool-anchor selection + Linear weight) folded matmul per image,
        # then eval-BatchNorm scale and the folded (bn_shift, fc bias) row.
        g = g_ref[...]                                       # (H*W, LPAD)
        bias = b2_ref[...]                                   # (Cout, LPAD)
        scale = cp_ref[:, 1:2]                               # (Cout, 1) BN scale
        for n in range(N):
            r = jnp.dot(a2[:, n * HW:(n + 1) * HW], g,
                        preferred_element_type=jnp.float32)  # (Cout, LPAD)
            o_ref[:, n * LPAD:(n + 1) * LPAD] = scale * r + bias

    return kernel


def model_forward(x, conv_w, conv_b, bn_scale, bn_shift, fc_w, fc_b):
    """The configured layer chain (applied sequentially), fused into one kernel."""
    N, Cin, H, W = x.shape
    Cout, _, KH, KW = conv_w.shape
    Ho, Wo = H - KH + 1, W - KW + 1
    Hp, Wp = Ho // 2, Wo // 2
    F = fc_w.shape[0]                    # torch Linear weight is (out, in)
    NHW, HW = N * H * W, H * W
    PAD = 128                            # lane tail so shifted reads never go OOB
    LPAD = 128                           # lane-aligned per-image output block >= Hp*F

    # ---- one-time, tiny layout/folding work (wrapper-side XLA glue) ----------
    # flat per-channel input: x2[c, n*H*W + i*W + j] = x[n, c, i, j], zero-padded.
    x2 = jnp.pad(jnp.transpose(x, (1, 0, 2, 3)).reshape(Cin, NHW).astype(jnp.float32),
                 ((0, 0), (0, PAD)))
    # conv weights as a lane-indexed VMEM tile: cw[co, (kh*KW+kw)*Cin + c].
    cw = jnp.transpose(conv_w, (0, 2, 3, 1)).reshape(Cout, KH * KW * Cin)
    # per-channel params: [:,0] conv bias, [:,1] BN scale.
    cp = jnp.stack([conv_b, bn_scale], axis=1).astype(jnp.float32)
    # G folds the even-anchor pool selection and the Linear weight into one
    # (H*W, LPAD) matrix: G[2p*W + 2q, p*F + f] = fc_w[f, q]; everything else 0.
    pi, qi, fi = jnp.meshgrid(jnp.arange(Hp), jnp.arange(Wp), jnp.arange(F),
                              indexing="ij")
    g1 = jnp.zeros((HW, LPAD), jnp.float32).at[
        (2 * pi * W + 2 * qi).reshape(-1),
        (pi * F + fi).reshape(-1)].set(fc_w.T[qi, fi].reshape(-1))
    # folded bias row: bn_shift[co]*sum_q fc_w[f,q] + fc_b[f], tiled over p, padded.
    b_small = bn_shift[:, None] * jnp.sum(fc_w, axis=1)[None, :] + fc_b[None, :]
    b2 = jnp.pad(jnp.broadcast_to(b_small[:, None, :], (Cout, Hp, F))
                 .reshape(Cout, Hp * F), ((0, 0), (0, LPAD - Hp * F)))

    vmem = pl.BlockSpec(memory_space=pltpu.MemorySpace.VMEM)
    kernel = _make_fused_kernel(N, Cin, H, W, Cout, KH, KW, Hp, Wp, F, LPAD, PAD)
    out = pl.pallas_call(
        kernel,
        out_shape=jax.ShapeDtypeStruct((Cout, N * LPAD), jnp.float32),
        in_specs=[vmem] * 5,
        out_specs=vmem,
        scratch_shapes=[pltpu.VMEM((Cout, NHW + PAD), jnp.float32)],
    )(x2, cw, cp, g1, b2)

    # lane-dense (Cout, N*LPAD) kernel output -> (N, Cout, Hp, F).
    out = out.reshape(Cout, N, LPAD)[:, :, :Hp * F].reshape(Cout, N, Hp, F)
    return jnp.transpose(out, (1, 0, 2, 3))


# ---------------------------------- main ------------------------------------ #

if __name__ == "__main__":
    key = jax.random.PRNGKey(0)
    ks = jax.random.split(key, 8)

    N, Cin, H, W = 2, 4, 16, 16
    Cout, K = 8, 3
    FC_IN, FC_OUT = 7, 16          # Linear over the last (pooled-width) dim
    eps = 1e-5

    x = jax.random.normal(ks[0], (N, Cin, H, W), jnp.float32)
    conv_w = 0.1 * jax.random.normal(ks[1], (Cout, Cin, K, K), jnp.float32)
    conv_b = 0.1 * jax.random.normal(ks[2], (Cout,), jnp.float32)
    gamma = 1.0 + 0.1 * jax.random.normal(ks[3], (Cout,), jnp.float32)
    beta = 0.1 * jax.random.normal(ks[4], (Cout,), jnp.float32)
    run_mean = 0.05 * jax.random.normal(ks[5], (Cout,), jnp.float32)
    run_var = jnp.abs(1.0 + 0.1 * jax.random.normal(ks[6], (Cout,), jnp.float32))
    fc_w = 0.1 * jax.random.normal(ks[7], (FC_OUT, FC_IN), jnp.float32)
    fc_b = jnp.linspace(-0.1, 0.1, FC_OUT).astype(jnp.float32)

    # fold eval-mode BN into a per-channel affine (glue done once, outside the kernel).
    bn_scale = gamma / jnp.sqrt(run_var + eps)
    bn_shift = beta - run_mean * bn_scale

    fwd = jax.jit(model_forward)
    out = jax.block_until_ready(fwd(x, conv_w, conv_b, bn_scale, bn_shift, fc_w, fc_b))

    # Pure-JAX reference of the same configured forward pass.
    ref = lax.conv_general_dilated(x, conv_w, (1, 1), "VALID",
                                   dimension_numbers=("NCHW", "OIHW", "NCHW"))
    ref = jnp.maximum(ref + conv_b[None, :, None, None], 0.0)
    ref = lax.reduce_window(ref, -jnp.inf, lax.max, (1, 1, 2, 2), (1, 1, 2, 2), "VALID")
    ref = ((ref - run_mean[None, :, None, None])
           / jnp.sqrt(run_var[None, :, None, None] + eps)
           * gamma[None, :, None, None] + beta[None, :, None, None])
    ref = jnp.einsum("nchw,ow->ncho", ref, fc_w) + fc_b

    assert out.shape == (N, Cout, 7, FC_OUT), out.shape
    err = float(jnp.max(jnp.abs(out - ref)))
    assert jnp.allclose(out, ref, rtol=1e-4, atol=1e-4), err
    print("KERNEL_OK")
</pallas_src>

<mosaic_0001>
module attributes {stable_mosaic.version = 11 : i64} {
  func.func @kernel(%arg0: memref<4x640xf32, #tpu.memory_space<vmem>>, %arg1: memref<8x36xf32, #tpu.memory_space<vmem>>, %arg2: memref<8x2xf32, #tpu.memory_space<vmem>>, %arg3: memref<256x128xf32, #tpu.memory_space<vmem>>, %arg4: memref<8x128xf32, #tpu.memory_space<vmem>>, %arg5: memref<8x256xf32, #tpu.memory_space<vmem>>, %arg6: memref<8x640xf32, #tpu.memory_space<vmem>>) attributes {dimension_semantics = [], scalar_prefetch = 0 : i64, scratch_operands = 1 : i64, tpu.core_type = #tpu.core_type<tc>} {
    %c0 = arith.constant 0 : index
    %c0_0 = arith.constant 0 : index
    %0 = vector.load %arg1[%c0, %c0_0] : memref<8x36xf32, #tpu.memory_space<vmem>>, vector<8x36xf32>
    %cst = arith.constant 0.000000e+00 : f32
    %1 = vector.broadcast %cst : f32 to vector<8x512xf32>
    %c0_1 = arith.constant 0 : index
    %c0_2 = arith.constant 0 : index
    %2 = vector.load %arg0[%c0_1, %c0_2] : memref<4x640xf32, #tpu.memory_space<vmem>>, vector<4x512xf32>
    %3 = vector.extract_strided_slice %0 {offsets = [0, 0], sizes = [8, 1], strides = [1, 1]} : vector<8x36xf32> to vector<8x1xf32>
    %4 = vector.extract_strided_slice %2 {offsets = [0, 0], sizes = [1, 512], strides = [1, 1]} : vector<4x512xf32> to vector<1x512xf32>
    %5 = vector.broadcast %3 : vector<8x1xf32> to vector<8x512xf32>
    %6 = vector.broadcast %4 : vector<1x512xf32> to vector<8x512xf32>
    %7 = arith.mulf %5, %6 : vector<8x512xf32>
    %8 = arith.addf %1, %7 : vector<8x512xf32>
    %9 = vector.extract_strided_slice %0 {offsets = [0, 1], sizes = [8, 1], strides = [1, 1]} : vector<8x36xf32> to vector<8x1xf32>
    %10 = vector.extract_strided_slice %2 {offsets = [1, 0], sizes = [1, 512], strides = [1, 1]} : vector<4x512xf32> to vector<1x512xf32>
    %11 = vector.broadcast %9 : vector<8x1xf32> to vector<8x512xf32>
    %12 = vector.broadcast %10 : vector<1x512xf32> to vector<8x512xf32>
    %13 = arith.mulf %11, %12 : vector<8x512xf32>
    %14 = arith.addf %8, %13 : vector<8x512xf32>
    %15 = vector.extract_strided_slice %0 {offsets = [0, 2], sizes = [8, 1], strides = [1, 1]} : vector<8x36xf32> to vector<8x1xf32>
    %16 = vector.extract_strided_slice %2 {offsets = [2, 0], sizes = [1, 512], strides = [1, 1]} : vector<4x512xf32> to vector<1x512xf32>
    %17 = vector.broadcast %15 : vector<8x1xf32> to vector<8x512xf32>
    %18 = vector.broadcast %16 : vector<1x512xf32> to vector<8x512xf32>
    %19 = arith.mulf %17, %18 : vector<8x512xf32>
    %20 = arith.addf %14, %19 : vector<8x512xf32>
    %21 = vector.extract_strided_slice %0 {offsets = [0, 3], sizes = [8, 1], strides = [1, 1]} : vector<8x36xf32> to vector<8x1xf32>
    %22 = vector.extract_strided_slice %2 {offsets = [3, 0], sizes = [1, 512], strides = [1, 1]} : vector<4x512xf32> to vector<1x512xf32>
    %23 = vector.broadcast %21 : vector<8x1xf32> to vector<8x512xf32>
    %24 = vector.broadcast %22 : vector<1x512xf32> to vector<8x512xf32>
    %25 = arith.mulf %23, %24 : vector<8x512xf32>
    %26 = arith.addf %20, %25 : vector<8x512xf32>
    %c0_3 = arith.constant 0 : index
    %c1 = arith.constant 1 : index
    %27 = vector.load %arg0[%c0_3, %c1] : memref<4x640xf32, #tpu.memory_space<vmem>>, vector<4x512xf32>
    %28 = vector.extract_strided_slice %0 {offsets = [0, 4], sizes = [8, 1], strides = [1, 1]} : vector<8x36xf32> to vector<8x1xf32>
    %29 = vector.extract_strided_slice %27 {offsets = [0, 0], sizes = [1, 512], strides = [1, 1]} : vector<4x512xf32> to vector<1x512xf32>
    %30 = vector.broadcast %28 : vector<8x1xf32> to vector<8x512xf32>
    %31 = vector.broadcast %29 : vector<1x512xf32> to vector<8x512xf32>
    %32 = arith.mulf %30, %31 : vector<8x512xf32>
    %33 = arith.addf %26, %32 : vector<8x512xf32>
    %34 = vector.extract_strided_slice %0 {offsets = [0, 5], sizes = [8, 1], strides = [1, 1]} : vector<8x36xf32> to vector<8x1xf32>
    %35 = vector.extract_strided_slice %27 {offsets = [1, 0], sizes = [1, 512], strides = [1, 1]} : vector<4x512xf32> to vector<1x512xf32>
    %36 = vector.broadcast %34 : vector<8x1xf32> to vector<8x512xf32>
    %37 = vector.broadcast %35 : vector<1x512xf32> to vector<8x512xf32>
    %38 = arith.mulf %36, %37 : vector<8x512xf32>
    %39 = arith.addf %33, %38 : vector<8x512xf32>
    %40 = vector.extract_strided_slice %0 {offsets = [0, 6], sizes = [8, 1], strides = [1, 1]} : vector<8x36xf32> to vector<8x1xf32>
    %41 = vector.extract_strided_slice %27 {offsets = [2, 0], sizes = [1, 512], strides = [1, 1]} : vector<4x512xf32> to vector<1x512xf32>
    %42 = vector.broadcast %40 : vector<8x1xf32> to vector<8x512xf32>
    %43 = vector.broadcast %41 : vector<1x512xf32> to vector<8x512xf32>
    %44 = arith.mulf %42, %43 : vector<8x512xf32>
    %45 = arith.addf %39, %44 : vector<8x512xf32>
    %46 = vector.extract_strided_slice %0 {offsets = [0, 7], sizes = [8, 1], strides = [1, 1]} : vector<8x36xf32> to vector<8x1xf32>
    %47 = vector.extract_strided_slice %27 {offsets = [3, 0], sizes = [1, 512], strides = [1, 1]} : vector<4x512xf32> to vector<1x512xf32>
    %48 = vector.broadcast %46 : vector<8x1xf32> to vector<8x512xf32>
    %49 = vector.broadcast %47 : vector<1x512xf32> to vector<8x512xf32>
    %50 = arith.mulf %48, %49 : vector<8x512xf32>
    %51 = arith.addf %45, %50 : vector<8x512xf32>
    %c0_4 = arith.constant 0 : index
    %c2 = arith.constant 2 : index
    %52 = vector.load %arg0[%c0_4, %c2] : memref<4x640xf32, #tpu.memory_space<vmem>>, vector<4x512xf32>
    %53 = vector.extract_strided_slice %0 {offsets = [0, 8], sizes = [8, 1], strides = [1, 1]} : vector<8x36xf32> to vector<8x1xf32>
    %54 = vector.extract_strided_slice %52 {offsets = [0, 0], sizes = [1, 512], strides = [1, 1]} : vector<4x512xf32> to vector<1x512xf32>
    %55 = vector.broadcast %53 : vector<8x1xf32> to vector<8x512xf32>
    %56 = vector.broadcast %54 : vector<1x512xf32> to vector<8x512xf32>
    %57 = arith.mulf %55, %56 : vector<8x512xf32>
    %58 = arith.addf %51, %57 : vector<8x512xf32>
    %59 = vector.extract_strided_slice %0 {offsets = [0, 9], sizes = [8, 1], strides = [1, 1]} : vector<8x36xf32> to vector<8x1xf32>
    %60 = vector.extract_strided_slice %52 {offsets = [1, 0], sizes = [1, 512], strides = [1, 1]} : vector<4x512xf32> to vector<1x512xf32>
    %61 = vector.broadcast %59 : vector<8x1xf32> to vector<8x512xf32>
    %62 = vector.broadcast %60 : vector<1x512xf32> to vector<8x512xf32>
    %63 = arith.mulf %61, %62 : vector<8x512xf32>
    %64 = arith.addf %58, %63 : vector<8x512xf32>
    %65 = vector.extract_strided_slice %0 {offsets = [0, 10], sizes = [8, 1], strides = [1, 1]} : vector<8x36xf32> to vector<8x1xf32>
    %66 = vector.extract_strided_slice %52 {offsets = [2, 0], sizes = [1, 512], strides = [1, 1]} : vector<4x512xf32> to vector<1x512xf32>
    %67 = vector.broadcast %65 : vector<8x1xf32> to vector<8x512xf32>
    %68 = vector.broadcast %66 : vector<1x512xf32> to vector<8x512xf32>
    %69 = arith.mulf %67, %68 : vector<8x512xf32>
    %70 = arith.addf %64, %69 : vector<8x512xf32>
    %71 = vector.extract_strided_slice %0 {offsets = [0, 11], sizes = [8, 1], strides = [1, 1]} : vector<8x36xf32> to vector<8x1xf32>
    %72 = vector.extract_strided_slice %52 {offsets = [3, 0], sizes = [1, 512], strides = [1, 1]} : vector<4x512xf32> to vector<1x512xf32>
    %73 = vector.broadcast %71 : vector<8x1xf32> to vector<8x512xf32>
    %74 = vector.broadcast %72 : vector<1x512xf32> to vector<8x512xf32>
    %75 = arith.mulf %73, %74 : vector<8x512xf32>
    %76 = arith.addf %70, %75 : vector<8x512xf32>
    %c0_5 = arith.constant 0 : index
    %c16 = arith.constant 16 : index
    %77 = vector.load %arg0[%c0_5, %c16] : memref<4x640xf32, #tpu.memory_space<vmem>>, vector<4x512xf32>
    %78 = vector.extract_strided_slice %0 {offsets = [0, 12], sizes = [8, 1], strides = [1, 1]} : vector<8x36xf32> to vector<8x1xf32>
    %79 = vector.extract_strided_slice %77 {offsets = [0, 0], sizes = [1, 512], strides = [1, 1]} : vector<4x512xf32> to vector<1x512xf32>
    %80 = vector.broadcast %78 : vector<8x1xf32> to vector<8x512xf32>
    %81 = vector.broadcast %79 : vector<1x512xf32> to vector<8x512xf32>
    %82 = arith.mulf %80, %81 : vector<8x512xf32>
    %83 = arith.addf %76, %82 : vector<8x512xf32>
    %84 = vector.extract_strided_slice %0 {offsets = [0, 13], sizes = [8, 1], strides = [1, 1]} : vector<8x36xf32> to vector<8x1xf32>
    %85 = vector.extract_strided_slice %77 {offsets = [1, 0], sizes = [1, 512], strides = [1, 1]} : vector<4x512xf32> to vector<1x512xf32>
    %86 = vector.broadcast %84 : vector<8x1xf32> to vector<8x512xf32>
    %87 = vector.broadcast %85 : vector<1x512xf32> to vector<8x512xf32>
    %88 = arith.mulf %86, %87 : vector<8x512xf32>
    %89 = arith.addf %83, %88 : vector<8x512xf32>
    %90 = vector.extract_strided_slice %0 {offsets = [0, 14], sizes = [8, 1], strides = [1, 1]} : vector<8x36xf32> to vector<8x1xf32>
    %91 = vector.extract_strided_slice %77 {offsets = [2, 0], sizes = [1, 512], strides = [1, 1]} : vector<4x512xf32> to vector<1x512xf32>
    %92 = vector.broadcast %90 : vector<8x1xf32> to vector<8x512xf32>
    %93 = vector.broadcast %91 : vector<1x512xf32> to vector<8x512xf32>
    %94 = arith.mulf %92, %93 : vector<8x512xf32>
    %95 = arith.addf %89, %94 : vector<8x512xf32>
    %96 = vector.extract_strided_slice %0 {offsets = [0, 15], sizes = [8, 1], strides = [1, 1]} : vector<8x36xf32> to vector<8x1xf32>
    %97 = vector.extract_strided_slice %77 {offsets = [3, 0], sizes = [1, 512], strides = [1, 1]} : vector<4x512xf32> to vector<1x512xf32>
    %98 = vector.broadcast %96 : vector<8x1xf32> to vector<8x512xf32>
    %99 = vector.broadcast %97 : vector<1x512xf32> to vector<8x512xf32>
    %100 = arith.mulf %98, %99 : vector<8x512xf32>
    %101 = arith.addf %95, %100 : vector<8x512xf32>
    %c0_6 = arith.constant 0 : index
    %c17 = arith.constant 17 : index
    %102 = vector.load %arg0[%c0_6, %c17] : memref<4x640xf32, #tpu.memory_space<vmem>>, vector<4x512xf32>
    %103 = vector.extract_strided_slice %0 {offsets = [0, 16], sizes = [8, 1], strides = [1, 1]} : vector<8x36xf32> to vector<8x1xf32>
    %104 = vector.extract_strided_slice %102 {offsets = [0, 0], sizes = [1, 512], strides = [1, 1]} : vector<4x512xf32> to vector<1x512xf32>
    %105 = vector.broadcast %103 : vector<8x1xf32> to vector<8x512xf32>
    %106 = vector.broadcast %104 : vector<1x512xf32> to vector<8x512xf32>
    %107 = arith.mulf %105, %106 : vector<8x512xf32>
    %108 = arith.addf %101, %107 : vector<8x512xf32>
    %109 = vector.extract_strided_slice %0 {offsets = [0, 17], sizes = [8, 1], strides = [1, 1]} : vector<8x36xf32> to vector<8x1xf32>
    %110 = vector.extract_strided_slice %102 {offsets = [1, 0], sizes = [1, 512], strides = [1, 1]} : vector<4x512xf32> to vector<1x512xf32>
    %111 = vector.broadcast %109 : vector<8x1xf32> to vector<8x512xf32>
    %112 = vector.broadcast %110 : vector<1x512xf32> to vector<8x512xf32>
    %113 = arith.mulf %111, %112 : vector<8x512xf32>
    %114 = arith.addf %108, %113 : vector<8x512xf32>
    %115 = vector.extract_strided_slice %0 {offsets = [0, 18], sizes = [8, 1], strides = [1, 1]} : vector<8x36xf32> to vector<8x1xf32>
    %116 = vector.extract_strided_slice %102 {offsets = [2, 0], sizes = [1, 512], strides = [1, 1]} : vector<4x512xf32> to vector<1x512xf32>
    %117 = vector.broadcast %115 : vector<8x1xf32> to vector<8x512xf32>
    %118 = vector.broadcast %116 : vector<1x512xf32> to vector<8x512xf32>
    %119 = arith.mulf %117, %118 : vector<8x512xf32>
    %120 = arith.addf %114, %119 : vector<8x512xf32>
    %121 = vector.extract_strided_slice %0 {offsets = [0, 19], sizes = [8, 1], strides = [1, 1]} : vector<8x36xf32> to vector<8x1xf32>
    %122 = vector.extract_strided_slice %102 {offsets = [3, 0], sizes = [1, 512], strides = [1, 1]} : vector<4x512xf32> to vector<1x512xf32>
    %123 = vector.broadcast %121 : vector<8x1xf32> to vector<8x512xf32>
    %124 = vector.broadcast %122 : vector<1x512xf32> to vector<8x512xf32>
    %125 = arith.mulf %123, %124 : vector<8x512xf32>
    %126 = arith.addf %120, %125 : vector<8x512xf32>
    %c0_7 = arith.constant 0 : index
    %c18 = arith.constant 18 : index
    %127 = vector.load %arg0[%c0_7, %c18] : memref<4x640xf32, #tpu.memory_space<vmem>>, vector<4x512xf32>
    %128 = vector.extract_strided_slice %0 {offsets = [0, 20], sizes = [8, 1], strides = [1, 1]} : vector<8x36xf32> to vector<8x1xf32>
    %129 = vector.extract_strided_slice %127 {offsets = [0, 0], sizes = [1, 512], strides = [1, 1]} : vector<4x512xf32> to vector<1x512xf32>
    %130 = vector.broadcast %128 : vector<8x1xf32> to vector<8x512xf32>
    %131 = vector.broadcast %129 : vector<1x512xf32> to vector<8x512xf32>
    %132 = arith.mulf %130, %131 : vector<8x512xf32>
    %133 = arith.addf %126, %132 : vector<8x512xf32>
    %134 = vector.extract_strided_slice %0 {offsets = [0, 21], sizes = [8, 1], strides = [1, 1]} : vector<8x36xf32> to vector<8x1xf32>
    %135 = vector.extract_strided_slice %127 {offsets = [1, 0], sizes = [1, 512], strides = [1, 1]} : vector<4x512xf32> to vector<1x512xf32>
    %136 = vector.broadcast %134 : vector<8x1xf32> to vector<8x512xf32>
    %137 = vector.broadcast %135 : vector<1x512xf32> to vector<8x512xf32>
    %138 = arith.mulf %136, %137 : vector<8x512xf32>
    %139 = arith.addf %133, %138 : vector<8x512xf32>
    %140 = vector.extract_strided_slice %0 {offsets = [0, 22], sizes = [8, 1], strides = [1, 1]} : vector<8x36xf32> to vector<8x1xf32>
    %141 = vector.extract_strided_slice %127 {offsets = [2, 0], sizes = [1, 512], strides = [1, 1]} : vector<4x512xf32> to vector<1x512xf32>
    %142 = vector.broadcast %140 : vector<8x1xf32> to vector<8x512xf32>
    %143 = vector.broadcast %141 : vector<1x512xf32> to vector<8x512xf32>
    %144 = arith.mulf %142, %143 : vector<8x512xf32>
    %145 = arith.addf %139, %144 : vector<8x512xf32>
    %146 = vector.extract_strided_slice %0 {offsets = [0, 23], sizes = [8, 1], strides = [1, 1]} : vector<8x36xf32> to vector<8x1xf32>
    %147 = vector.extract_strided_slice %127 {offsets = [3, 0], sizes = [1, 512], strides = [1, 1]} : vector<4x512xf32> to vector<1x512xf32>
    %148 = vector.broadcast %146 : vector<8x1xf32> to vector<8x512xf32>
    %149 = vector.broadcast %147 : vector<1x512xf32> to vector<8x512xf32>
    %150 = arith.mulf %148, %149 : vector<8x512xf32>
    %151 = arith.addf %145, %150 : vector<8x512xf32>
    %c0_8 = arith.constant 0 : index
    %c32 = arith.constant 32 : index
    %152 = vector.load %arg0[%c0_8, %c32] : memref<4x640xf32, #tpu.memory_space<vmem>>, vector<4x512xf32>
    %153 = vector.extract_strided_slice %0 {offsets = [0, 24], sizes = [8, 1], strides = [1, 1]} : vector<8x36xf32> to vector<8x1xf32>
    %154 = vector.extract_strided_slice %152 {offsets = [0, 0], sizes = [1, 512], strides = [1, 1]} : vector<4x512xf32> to vector<1x512xf32>
    %155 = vector.broadcast %153 : vector<8x1xf32> to vector<8x512xf32>
    %156 = vector.broadcast %154 : vector<1x512xf32> to vector<8x512xf32>
    %157 = arith.mulf %155, %156 : vector<8x512xf32>
    %158 = arith.addf %151, %157 : vector<8x512xf32>
    %159 = vector.extract_strided_slice %0 {offsets = [0, 25], sizes = [8, 1], strides = [1, 1]} : vector<8x36xf32> to vector<8x1xf32>
    %160 = vector.extract_strided_slice %152 {offsets = [1, 0], sizes = [1, 512], strides = [1, 1]} : vector<4x512xf32> to vector<1x512xf32>
    %161 = vector.broadcast %159 : vector<8x1xf32> to vector<8x512xf32>
    %162 = vector.broadcast %160 : vector<1x512xf32> to vector<8x512xf32>
    %163 = arith.mulf %161, %162 : vector<8x512xf32>
    %164 = arith.addf %158, %163 : vector<8x512xf32>
    %165 = vector.extract_strided_slice %0 {offsets = [0, 26], sizes = [8, 1], strides = [1, 1]} : vector<8x36xf32> to vector<8x1xf32>
    %166 = vector.extract_strided_slice %152 {offsets = [2, 0], sizes = [1, 512], strides = [1, 1]} : vector<4x512xf32> to vector<1x512xf32>
    %167 = vector.broadcast %165 : vector<8x1xf32> to vector<8x512xf32>
    %168 = vector.broadcast %166 : vector<1x512xf32> to vector<8x512xf32>
    %169 = arith.mulf %167, %168 : vector<8x512xf32>
    %170 = arith.addf %164, %169 : vector<8x512xf32>
    %171 = vector.extract_strided_slice %0 {offsets = [0, 27], sizes = [8, 1], strides = [1, 1]} : vector<8x36xf32> to vector<8x1xf32>
    %172 = vector.extract_strided_slice %152 {offsets = [3, 0], sizes = [1, 512], strides = [1, 1]} : vector<4x512xf32> to vector<1x512xf32>
    %173 = vector.broadcast %171 : vector<8x1xf32> to vector<8x512xf32>
    %174 = vector.broadcast %172 : vector<1x512xf32> to vector<8x512xf32>
    %175 = arith.mulf %173, %174 : vector<8x512xf32>
    %176 = arith.addf %170, %175 : vector<8x512xf32>
    %c0_9 = arith.constant 0 : index
    %c33 = arith.constant 33 : index
    %177 = vector.load %arg0[%c0_9, %c33] : memref<4x640xf32, #tpu.memory_space<vmem>>, vector<4x512xf32>
    %178 = vector.extract_strided_slice %0 {offsets = [0, 28], sizes = [8, 1], strides = [1, 1]} : vector<8x36xf32> to vector<8x1xf32>
    %179 = vector.extract_strided_slice %177 {offsets = [0, 0], sizes = [1, 512], strides = [1, 1]} : vector<4x512xf32> to vector<1x512xf32>
    %180 = vector.broadcast %178 : vector<8x1xf32> to vector<8x512xf32>
    %181 = vector.broadcast %179 : vector<1x512xf32> to vector<8x512xf32>
    %182 = arith.mulf %180, %181 : vector<8x512xf32>
    %183 = arith.addf %176, %182 : vector<8x512xf32>
    %184 = vector.extract_strided_slice %0 {offsets = [0, 29], sizes = [8, 1], strides = [1, 1]} : vector<8x36xf32> to vector<8x1xf32>
    %185 = vector.extract_strided_slice %177 {offsets = [1, 0], sizes = [1, 512], strides = [1, 1]} : vector<4x512xf32> to vector<1x512xf32>
    %186 = vector.broadcast %184 : vector<8x1xf32> to vector<8x512xf32>
    %187 = vector.broadcast %185 : vector<1x512xf32> to vector<8x512xf32>
    %188 = arith.mulf %186, %187 : vector<8x512xf32>
    %189 = arith.addf %183, %188 : vector<8x512xf32>
    %190 = vector.extract_strided_slice %0 {offsets = [0, 30], sizes = [8, 1], strides = [1, 1]} : vector<8x36xf32> to vector<8x1xf32>
    %191 = vector.extract_strided_slice %177 {offsets = [2, 0], sizes = [1, 512], strides = [1, 1]} : vector<4x512xf32> to vector<1x512xf32>
    %192 = vector.broadcast %190 : vector<8x1xf32> to vector<8x512xf32>
    %193 = vector.broadcast %191 : vector<1x512xf32> to vector<8x512xf32>
    %194 = arith.mulf %192, %193 : vector<8x512xf32>
    %195 = arith.addf %189, %194 : vector<8x512xf32>
    %196 = vector.extract_strided_slice %0 {offsets = [0, 31], sizes = [8, 1], strides = [1, 1]} : vector<8x36xf32> to vector<8x1xf32>
    %197 = vector.extract_strided_slice %177 {offsets = [3, 0], sizes = [1, 512], strides = [1, 1]} : vector<4x512xf32> to vector<1x512xf32>
    %198 = vector.broadcast %196 : vector<8x1xf32> to vector<8x512xf32>
    %199 = vector.broadcast %197 : vector<1x512xf32> to vector<8x512xf32>
    %200 = arith.mulf %198, %199 : vector<8x512xf32>
    %201 = arith.addf %195, %200 : vector<8x512xf32>
    %c0_10 = arith.constant 0 : index
    %c34 = arith.constant 34 : index
    %202 = vector.load %arg0[%c0_10, %c34] : memref<4x640xf32, #tpu.memory_space<vmem>>, vector<4x512xf32>
    %203 = vector.extract_strided_slice %0 {offsets = [0, 32], sizes = [8, 1], strides = [1, 1]} : vector<8x36xf32> to vector<8x1xf32>
    %204 = vector.extract_strided_slice %202 {offsets = [0, 0], sizes = [1, 512], strides = [1, 1]} : vector<4x512xf32> to vector<1x512xf32>
    %205 = vector.broadcast %203 : vector<8x1xf32> to vector<8x512xf32>
    %206 = vector.broadcast %204 : vector<1x512xf32> to vector<8x512xf32>
    %207 = arith.mulf %205, %206 : vector<8x512xf32>
    %208 = arith.addf %201, %207 : vector<8x512xf32>
    %209 = vector.extract_strided_slice %0 {offsets = [0, 33], sizes = [8, 1], strides = [1, 1]} : vector<8x36xf32> to vector<8x1xf32>
    %210 = vector.extract_strided_slice %202 {offsets = [1, 0], sizes = [1, 512], strides = [1, 1]} : vector<4x512xf32> to vector<1x512xf32>
    %211 = vector.broadcast %209 : vector<8x1xf32> to vector<8x512xf32>
    %212 = vector.broadcast %210 : vector<1x512xf32> to vector<8x512xf32>
    %213 = arith.mulf %211, %212 : vector<8x512xf32>
    %214 = arith.addf %208, %213 : vector<8x512xf32>
    %215 = vector.extract_strided_slice %0 {offsets = [0, 34], sizes = [8, 1], strides = [1, 1]} : vector<8x36xf32> to vector<8x1xf32>
    %216 = vector.extract_strided_slice %202 {offsets = [2, 0], sizes = [1, 512], strides = [1, 1]} : vector<4x512xf32> to vector<1x512xf32>
    %217 = vector.broadcast %215 : vector<8x1xf32> to vector<8x512xf32>
    %218 = vector.broadcast %216 : vector<1x512xf32> to vector<8x512xf32>
    %219 = arith.mulf %217, %218 : vector<8x512xf32>
    %220 = arith.addf %214, %219 : vector<8x512xf32>
    %221 = vector.extract_strided_slice %0 {offsets = [0, 35], sizes = [8, 1], strides = [1, 1]} : vector<8x36xf32> to vector<8x1xf32>
    %222 = vector.extract_strided_slice %202 {offsets = [3, 0], sizes = [1, 512], strides = [1, 1]} : vector<4x512xf32> to vector<1x512xf32>
    %223 = vector.broadcast %221 : vector<8x1xf32> to vector<8x512xf32>
    %224 = vector.broadcast %222 : vector<1x512xf32> to vector<8x512xf32>
    %225 = arith.mulf %223, %224 : vector<8x512xf32>
    %226 = arith.addf %220, %225 : vector<8x512xf32>
    %c0_11 = arith.constant 0 : index
    %c0_12 = arith.constant 0 : index
    %227 = vector.load %arg2[%c0_11, %c0_12] : memref<8x2xf32, #tpu.memory_space<vmem>>, vector<8x1xf32>
    %228 = vector.broadcast %227 : vector<8x1xf32> to vector<8x512xf32>
    %229 = arith.addf %226, %228 : vector<8x512xf32>
    %cst_13 = arith.constant 0.000000e+00 : f32
    %230 = vector.broadcast %cst_13 : f32 to vector<8x512xf32>
    %231 = arith.maximumf %229, %230 : vector<8x512xf32>
    %cst_14 = arith.constant 0.000000e+00 : f32
    %232 = vector.broadcast %cst_14 : f32 to vector<8x128xf32>
    %c0_15 = arith.constant 0 : index
    %c512 = arith.constant 512 : index
    %233 = vector.load %arg6[%c0_15, %c512] : memref<8x640xf32, #tpu.memory_space<vmem>>, vector<8x128xf32>
    tpu.vector_store %arg6[%c0_15, %c512], %232 {strides = array<i32>} : memref<8x640xf32, #tpu.memory_space<vmem>>, vector<8x128xf32>,
    %c0_16 = arith.constant 0 : index
    %c0_17 = arith.constant 0 : index
    %234 = vector.load %arg6[%c0_16, %c0_17] : memref<8x640xf32, #tpu.memory_space<vmem>>, vector<8x512xf32>
    tpu.vector_store %arg6[%c0_16, %c0_17], %231 {strides = array<i32>} : memref<8x640xf32, #tpu.memory_space<vmem>>, vector<8x512xf32>,
    %c0_18 = arith.constant 0 : index
    %c1_19 = arith.constant 1 : index
    %235 = vector.load %arg6[%c0_18, %c1_19] : memref<8x640xf32, #tpu.memory_space<vmem>>, vector<8x512xf32>
    %236 = arith.maximumf %231, %235 : vector<8x512xf32>
    %c0_20 = arith.constant 0 : index
    %c16_21 = arith.constant 16 : index
    %237 = vector.load %arg6[%c0_20, %c16_21] : memref<8x640xf32, #tpu.memory_space<vmem>>, vector<8x512xf32>
    %c0_22 = arith.constant 0 : index
    %c17_23 = arith.constant 17 : index
    %238 = vector.load %arg6[%c0_22, %c17_23] : memref<8x640xf32, #tpu.memory_space<vmem>>, vector<8x512xf32>
    %239 = arith.maximumf %237, %238 : vector<8x512xf32>
    %240 = arith.maximumf %236, %239 : vector<8x512xf32>
    %c0_24 = arith.constant 0 : index
    %c0_25 = arith.constant 0 : index
    %241 = vector.load %arg3[%c0_24, %c0_25] : memref<256x128xf32, #tpu.memory_space<vmem>>, vector<256x128xf32>
    %c0_26 = arith.constant 0 : index
    %c0_27 = arith.constant 0 : index
    %242 = vector.load %arg4[%c0_26, %c0_27] : memref<8x128xf32, #tpu.memory_space<vmem>>, vector<8x128xf32>
    %c0_28 = arith.constant 0 : index
    %c1_29 = arith.constant 1 : index
    %243 = vector.load %arg2[%c0_28, %c1_29] : memref<8x2xf32, #tpu.memory_space<vmem>>, vector<8x1xf32>
    %244 = vector.extract_strided_slice %240 {offsets = [0, 0], sizes = [8, 256], strides = [1, 1]} : vector<8x512xf32> to vector<8x256xf32>
    %cst_30 = arith.constant dense<0.000000e+00> : vector<8x128xf32>
    %245 = tpu.matmul %244, %241, %cst_30 {dimension_numbers = #tpu.dot_dimension_numbers<[1], [0], [0], [1], [0, 0, 1, 1], [], []>} : vector<8x256xf32>, vector<256x128xf32>, vector<8x128xf32> -> vector<8x128xf32>
    %246 = vector.broadcast %243 : vector<8x1xf32> to vector<8x128xf32>
    %247 = arith.mulf %246, %245 : vector<8x128xf32>
    %248 = arith.addf %247, %242 : vector<8x128xf32>
    %c0_31 = arith.constant 0 : index
    %c0_32 = arith.constant 0 : index
    %249 = vector.load %arg5[%c0_31, %c0_32] : memref<8x256xf32, #tpu.memory_space<vmem>>, vector<8x128xf32>
    tpu.vector_store %arg5[%c0_31, %c0_32], %248 {strides = array<i32>} : memref<8x256xf32, #tpu.memory_space<vmem>>, vector<8x128xf32>,
    %250 = vector.extract_strided_slice %240 {offsets = [0, 256], sizes = [8, 256], strides = [1, 1]} : vector<8x512xf32> to vector<8x256xf32>
    %cst_33 = arith.constant dense<0.000000e+00> : vector<8x128xf32>
    %251 = tpu.matmul %250, %241, %cst_33 {dimension_numbers = #tpu.dot_dimension_numbers<[1], [0], [0], [1], [0, 0, 1, 1], [], []>} : vector<8x256xf32>, vector<256x128xf32>, vector<8x128xf32> -> vector<8x128xf32>
    %252 = vector.broadcast %243 : vector<8x1xf32> to vector<8x128xf32>
    %253 = arith.mulf %252, %251 : vector<8x128xf32>
    %254 = arith.addf %253, %242 : vector<8x128xf32>
    %c0_34 = arith.constant 0 : index
    %c128 = arith.constant 128 : index
    %255 = vector.load %arg5[%c0_34, %c128] : memref<8x256xf32, #tpu.memory_space<vmem>>, vector<8x128xf32>
    tpu.vector_store %arg5[%c0_34, %c128], %254 {strides = array<i32>} : memref<8x256xf32, #tpu.memory_space<vmem>>, vector<8x128xf32>,
    return
  }
}

</mosaic_0001>

<llo_original>
// kernel: model_forward.1
$region0: #{model_forward.1}
  #allocation0 [shape = 'u32[]', space=smem, size = 0x4, offset = 0x4, fixed_abs, tag = 'smem constant byte address 0x4 - core index']
  #allocation1 [shape = 'u32[144,128]{1,0:T(1,128)}', space=vmem, size = 0x12000, scoped, tag = 'internal scratch']
  #allocation2 [shape = 'f32[8,640]{1,0:T(8,128)}', space=vmem, size = 0x5000, scoped, tag = 'scratch operand']
  %s0 = inlined_call_operand.vmem [shape: f32[4,640], index: 0, kind: input, shape index: {}]
  %s1 = inlined_call_operand.vmem [shape: f32[8,36], index: 1, kind: input, shape index: {}]
  %s2 = inlined_call_operand.vmem [shape: f32[8,2], index: 2, kind: input, shape index: {}]
  %s3 = inlined_call_operand.vmem [shape: f32[256,128], index: 3, kind: input, shape index: {}]
  %s4 = inlined_call_operand.vmem [shape: f32[8,128], index: 4, kind: input, shape index: {}]
  %s5 = inlined_call_operand.vmem [shape: f32[8,256], index: 5, kind: output, shape index: {}]
  %s6 = sld [smem:[#allocation0]]
  $region30: #{model_forward.1} parent=0
    _
  %s8 = ssub.s32 1, %s6
  %s9 = scalar_select 0, %s8, %s6
  // Predicated region
  $region2: #{model_forward.1} parent=0 // pred_check
    _
  $region3: #{model_forward.1} parent=0 // pred_check_branch
    %11 = sbr.rel (0) target = $region5
  $region4: #{model_forward.1} parent=0 // pred_region
    _
  $region5: #{model_forward.1} parent=0 // pred_fallthru
    _
  // Predicated region
  $region6: #{model_forward.1} parent=0 // pred_check
    _
  $region7: #{model_forward.1} parent=0 // pred_check_branch
    %13 = sbr.rel (0) target = $region9
  $region8: #{model_forward.1} parent=0 // pred_region
    _
  $region9: #{model_forward.1} parent=0 // pred_fallthru
    _
  // Predicated region
  $region10: #{model_forward.1} parent=0 // pred_check
    _
  $region11: #{model_forward.1} parent=0 // pred_check_branch
    %15 = sbr.rel (0) target = $region13
  $region12: #{model_forward.1} parent=0 // pred_region
    _
  $region13: #{model_forward.1} parent=0 // pred_fallthru
    _
  // Predicated region
  $region14: #{model_forward.1} parent=0 // pred_check
    _
  $region15: #{model_forward.1} parent=0 // pred_check_branch
    %17 = sbr.rel (0) target = $region17
  $region16: #{model_forward.1} parent=0 // pred_region
    _
  $region17: #{model_forward.1} parent=0 // pred_fallthru
    _
  // Predicated region
  $region18: #{model_forward.1} parent=0 // pred_check
    _
  $region19: #{model_forward.1} parent=0 // pred_check_branch
    %19 = sbr.rel (0) target = $region21
  $region20: #{model_forward.1} parent=0 // pred_region
    _
  $region21: #{model_forward.1} parent=0 // pred_fallthru
    _
  %v20 = vld [vmem:[%s1] sm:$0xff]
  %v21 = vld [vmem:[%s0] sm:$0xff]
  %v22 = vld [vmem:[%s0 + $0x8] sm:$0xff]
  %24 = vset.pattern.permute.xlu0 0
  %25 = vperm.xlu0 %24, %v20
  %v26 = vpop.permute.xlu0 %25
  %v30 = vlaneseq
  %v31 = vshrl.u32 %v30, 7
  %v32 = vsub.s32 0, %v31
  %v33 = vrot.slane %v21, %v32
  %v34 = vlaneseq
  %v35 = vshrl.u32 %v34, 7
  %v36 = vsub.s32 4, %v35
  %v37 = vrot.slane %v21, %v36
  %v38 = vlaneseq
  %v39 = vshrl.u32 %v38, 7
  %v40 = vsub.s32 0, %v39
  %v41 = vrot.slane %v22, %v40
  %v42 = vlaneseq
  %v43 = vshrl.u32 %v42, 7
  %v44 = vsub.s32 4, %v43
  %v45 = vrot.slane %v22, %v44
  %v50 = vlaneseq
  %v51 = vshrl.u32 %v50, 7
  %v52 = vsub.s32 0, %v51
  %v53 = vrot.slane %v33, %v52
  %v54 = vlaneseq
  %v55 = vshrl.u32 %v54, 7
  %v56 = vsub.s32 0, %v55
  %v57 = vrot.slane %v37, %v56
  %v58 = vlaneseq
  %v59 = vshrl.u32 %v58, 7
  %v60 = vsub.s32 0, %v59
  %v61 = vrot.slane %v41, %v60
  %v62 = vlaneseq
  %v63 = vshrl.u32 %v62, 7
  %v64 = vsub.s32 0, %v63
  %v65 = vrot.slane %v45, %v64
  %v66 = vmul.f32 %v26, %v53
  %v67 = vmul.f32 %v26, %v57
  %v68 = vmul.f32 %v26, %v61
  %v69 = vmul.f32 %v26, %v65
  %v70 = vadd.f32 %v66, 0.0
  %v71 = vadd.f32 %v67, 0.0
  %v72 = vadd.f32 %v68, 0.0
  %v73 = vadd.f32 %v69, 0.0
  %74 = vset.pattern.permute.xlu0 1
  %75 = vperm.xlu0 %74, %v20
  %v76 = vpop.permute.xlu0 %75
  %v78 = vlaneseq
  %v79 = vshrl.u32 %v78, 7
  %v80 = vsub.s32 1, %v79
  %v81 = vrot.slane %v21, %v80
  %v82 = vlaneseq
  %v83 = vshrl.u32 %v82, 7
  %v84 = vsub.s32 5, %v83
  %v85 = vrot.slane %v21, %v84
  %v86 = vlaneseq
  %v87 = vshrl.u32 %v86, 7
  %v88 = vsub.s32 1, %v87
  %v89 = vrot.slane %v22, %v88
  %v90 = vlaneseq
  %v91 = vshrl.u32 %v90, 7
  %v92 = vsub.s32 5, %v91
  %v93 = vrot.slane %v22, %v92
  %v98 = vlaneseq
  %v99 = vshrl.u32 %v98, 7
  %v100 = vsub.s32 1, %v99
  %v101 = vrot.slane %v81, %v100
  %v102 = vlaneseq
  %v103 = vshrl.u32 %v102, 7
  %v104 = vsub.s32 1, %v103
  %v105 = vrot.slane %v85, %v104
  %v106 = vlaneseq
  %v107 = vshrl.u32 %v106, 7
  %v108 = vsub.s32 1, %v107
  %v109 = vrot.slane %v89, %v108
  %v110 = vlaneseq
  %v111 = vshrl.u32 %v110, 7
  %v112 = vsub.s32 1, %v111
  %v113 = vrot.slane %v93, %v112
  %v114 = vmul.f32 %v76, %v101
  %v115 = vmul.f32 %v76, %v105
  %v116 = vmul.f32 %v76, %v109
  %v117 = vmul.f32 %v76, %v113
  %v118 = vadd.f32 %v70, %v114
  %v119 = vadd.f32 %v71, %v115
  %v120 = vadd.f32 %v72, %v116
  %v121 = vadd.f32 %v73, %v117
  %122 = vset.pattern.permute.xlu0 2
  %123 = vperm.xlu0 %122, %v20
  %v124 = vpop.permute.xlu0 %123
  %v126 = vlaneseq
  %v127 = vshrl.u32 %v126, 7
  %v128 = vsub.s32 2, %v127
  %v129 = vrot.slane %v21, %v128
  %v130 = vlaneseq
  %v131 = vshrl.u32 %v130, 7
  %v132 = vsub.s32 6, %v131
  %v133 = vrot.slane %v21, %v132
  %v134 = vlaneseq
  %v135 = vshrl.u32 %v134, 7
  %v136 = vsub.s32 2, %v135
  %v137 = vrot.slane %v22, %v136
  %v138 = vlaneseq
  %v139 = vshrl.u32 %v138, 7
  %v140 = vsub.s32 6, %v139
  %v141 = vrot.slane %v22, %v140
  %v146 = vlaneseq
  %v147 = vshrl.u32 %v146, 7
  %v148 = vsub.s32 2, %v147
  %v149 = vrot.slane %v129, %v148
  %v150 = vlaneseq
  %v151 = vshrl.u32 %v150, 7
  %v152 = vsub.s32 2, %v151
  %v153 = vrot.slane %v133, %v152
  %v154 = vlaneseq
  %v155 = vshrl.u32 %v154, 7
  %v156 = vsub.s32 2, %v155
  %v157 = vrot.slane %v137, %v156
  %v158 = vlaneseq
  %v159 = vshrl.u32 %v158, 7
  %v160 = vsub.s32 2, %v159
  %v161 = vrot.slane %v141, %v160
  %v162 = vmul.f32 %v124, %v149
  %v163 = vmul.f32 %v124, %v153
  %v164 = vmul.f32 %v124, %v157
  %v165 = vmul.f32 %v124, %v161
  %v166 = vadd.f32 %v118, %v162
  %v167 = vadd.f32 %v119, %v163
  %v168 = vadd.f32 %v120, %v164
  %v169 = vadd.f32 %v121, %v165
  %170 = vset.pattern.permute.xlu0 3
  %171 = vperm.xlu0 %170, %v20
  %v172 = vpop.permute.xlu0 %171
  %v174 = vlaneseq
  %v175 = vshrl.u32 %v174, 7
  %v176 = vsub.s32 3, %v175
  %v177 = vrot.slane %v21, %v176
  %v178 = vlaneseq
  %v179 = vshrl.u32 %v178, 7
  %v180 = vsub.s32 7, %v179
  %v181 = vrot.slane %v21, %v180
  %v182 = vlaneseq
  %v183 = vshrl.u32 %v182, 7
  %v184 = vsub.s32 3, %v183
  %v185 = vrot.slane %v22, %v184
  %v186 = vlaneseq
  %v187 = vshrl.u32 %v186, 7
  %v188 = vsub.s32 7, %v187
  %v189 = vrot.slane %v22, %v188
  %v194 = vlaneseq
  %v195 = vshrl.u32 %v194, 7
  %v196 = vsub.s32 3, %v195
  %v197 = vrot.slane %v177, %v196
  %v198 = vlaneseq
  %v199 = vshrl.u32 %v198, 7
  %v200 = vsub.s32 3, %v199
  %v201 = vrot.slane %v181, %v200
  %v202 = vlaneseq
  %v203 = vshrl.u32 %v202, 7
  %v204 = vsub.s32 3, %v203
  %v205 = vrot.slane %v185, %v204
  %v206 = vlaneseq
  %v207 = vshrl.u32 %v206, 7
  %v208 = vsub.s32 3, %v207
  %v209 = vrot.slane %v189, %v208
  %v210 = vmul.f32 %v172, %v197
  %v211 = vmul.f32 %v172, %v201
  %v212 = vmul.f32 %v172, %v205
  %v213 = vmul.f32 %v172, %v209
  %v214 = vadd.f32 %v166, %v210
  %v215 = vadd.f32 %v167, %v211
  %v216 = vadd.f32 %v168, %v212
  %v217 = vadd.f32 %v169, %v213
  %v218 = vld [vmem:[%s0] sm:$0xff]
  %v219 = vld [vmem:[%s0 + $0x8] sm:$0xff]
  %v220 = vld [vmem:[%s0 + $0x10] sm:$0xf]
  %221 = vset.pattern.permute.xlu0 4
  %222 = vperm.xlu0 %221, %v20
  %v223 = vpop.permute.xlu0 %222
  %v228 = vlaneseq
  %v229 = vshrl.u32 %v228, 7
  %v230 = vsub.s32 0, %v229
  %v231 = vrot.slane %v218, %v230
  %v232 = vlaneseq
  %v233 = vshrl.u32 %v232, 7
  %v234 = vsub.s32 4, %v233
  %v235 = vrot.slane %v218, %v234
  %v236 = vlaneseq
  %v237 = vshrl.u32 %v236, 7
  %v238 = vsub.s32 0, %v237
  %v239 = vrot.slane %v219, %v238
  %v240 = vlaneseq
  %v241 = vshrl.u32 %v240, 7
  %v242 = vsub.s32 4, %v241
  %v243 = vrot.slane %v219, %v242
  %v244 = vlaneseq
  %v245 = vshrl.u32 %v244, 7
  %v246 = vsub.s32 0, %v245
  %v247 = vrot.slane %v220, %v246
  %v253 = vlaneseq
  %v254 = vshrl.u32 %v253, 7
  %v255 = vsub.s32 0, %v254
  %v256 = vrot.slane %v231, %v255
  %v257 = vlaneseq
  %v258 = vshrl.u32 %v257, 7
  %v259 = vsub.s32 0, %v258
  %v260 = vrot.slane %v235, %v259
  %v261 = vlaneseq
  %v262 = vshrl.u32 %v261, 7
  %v263 = vsub.s32 0, %v262
  %v264 = vrot.slane %v239, %v263
  %v265 = vlaneseq
  %v266 = vshrl.u32 %v265, 7
  %v267 = vsub.s32 0, %v266
  %v268 = vrot.slane %v243, %v267
  %v269 = vlaneseq
  %v270 = vshrl.u32 %v269, 7
  %v271 = vsub.s32 0, %v270
  %v272 = vrot.slane %v247, %v271
  %v273 = vmul.f32 %v223, %v256
  %v274 = vmul.f32 %v223, %v260
  %v275 = vmul.f32 %v223, %v264
  %v276 = vmul.f32 %v223, %v268
  %v277 = vmul.f32 %v223, %v272
  %283 = vrot.lane.b32.xlu0 %v273, 127
  %v284 = vpop.permute.xlu0 %283
  %285 = vrot.lane.b32.xlu0 %v274, 127
  %v286 = vpop.permute.xlu0 %285
  %287 = vrot.lane.b32.xlu0 %v275, 127
  %v288 = vpop.permute.xlu0 %287
  %289 = vrot.lane.b32.xlu0 %v276, 127
  %v290 = vpop.permute.xlu0 %289
  %291 = vrot.lane.b32.xlu0 %v277, 127
  %v292 = vpop.permute.xlu0 %291
  %vm293 = vcmask 1039360
  %v294 = vsel %vm293, %v284, %v286
  %v295 = vsel %vm293, %v286, %v288
  %v296 = vsel %vm293, %v288, %v290
  %v297 = vsel %vm293, %v290, %v292
  %v302 = vadd.f32 %v214, %v294
  %v303 = vadd.f32 %v215, %v295
  %v304 = vadd.f32 %v216, %v296
  %v305 = vadd.f32 %v217, %v297
  %306 = vset.pattern.permute.xlu0 5
  %307 = vperm.xlu0 %306, %v20
  %v308 = vpop.permute.xlu0 %307
  %v310 = vlaneseq
  %v311 = vshrl.u32 %v310, 7
  %v312 = vsub.s32 1, %v311
  %v313 = vrot.slane %v218, %v312
  %v314 = vlaneseq
  %v315 = vshrl.u32 %v314, 7
  %v316 = vsub.s32 5, %v315
  %v317 = vrot.slane %v218, %v316
  %v318 = vlaneseq
  %v319 = vshrl.u32 %v318, 7
  %v320 = vsub.s32 1, %v319
  %v321 = vrot.slane %v219, %v320
  %v322 = vlaneseq
  %v323 = vshrl.u32 %v322, 7
  %v324 = vsub.s32 5, %v323
  %v325 = vrot.slane %v219, %v324
  %v326 = vlaneseq
  %v327 = vshrl.u32 %v326, 7
  %v328 = vsub.s32 1, %v327
  %v329 = vrot.slane %v220, %v328
  %v335 = vlaneseq
  %v336 = vshrl.u32 %v335, 7
  %v337 = vsub.s32 1, %v336
  %v338 = vrot.slane %v313, %v337
  %v339 = vlaneseq
  %v340 = vshrl.u32 %v339, 7
  %v341 = vsub.s32 1, %v340
  %v342 = vrot.slane %v317, %v341
  %v343 = vlaneseq
  %v344 = vshrl.u32 %v343, 7
  %v345 = vsub.s32 1, %v344
  %v346 = vrot.slane %v321, %v345
  %v347 = vlaneseq
  %v348 = vshrl.u32 %v347, 7
  %v349 = vsub.s32 1, %v348
  %v350 = vrot.slane %v325, %v349
  %v351 = vlaneseq
  %v352 = vshrl.u32 %v351, 7
  %v353 = vsub.s32 1, %v352
  %v354 = vrot.slane %v329, %v353
  %v355 = vmul.f32 %v308, %v338
  %v356 = vmul.f32 %v308, %v342
  %v357 = vmul.f32 %v308, %v346
  %v358 = vmul.f32 %v308, %v350
  %v359 = vmul.f32 %v308, %v354
  %365 = vrot.lane.b32.xlu0 %v355, 127
  %v366 = vpop.permute.xlu0 %365
  %367 = vrot.lane.b32.xlu0 %v356, 127
  %v368 = vpop.permute.xlu0 %367
  %369 = vrot.lane.b32.xlu0 %v357, 127
  %v370 = vpop.permute.xlu0 %369
  %371 = vrot.lane.b32.xlu0 %v358, 127
  %v372 = vpop.permute.xlu0 %371
  %373 = vrot.lane.b32.xlu0 %v359, 127
  %v374 = vpop.permute.xlu0 %373
  %v375 = vsel %vm293, %v366, %v368
  %v376 = vsel %vm293, %v368, %v370
  %v377 = vsel %vm293, %v370, %v372
  %v378 = vsel %vm293, %v372, %v374
  %v383 = vadd.f32 %v302, %v375
  %v384 = vadd.f32 %v303, %v376
  %v385 = vadd.f32 %v304, %v377
  %v386 = vadd.f32 %v305, %v378
  %387 = vset.pattern.permute.xlu0 6
  %388 = vperm.xlu0 %387, %v20
  %v389 = vpop.permute.xlu0 %388
  %v391 = vlaneseq
  %v392 = vshrl.u32 %v391, 7
  %v393 = vsub.s32 2, %v392
  %v394 = vrot.slane %v218, %v393
  %v395 = vlaneseq
  %v396 = vshrl.u32 %v395, 7
  %v397 = vsub.s32 6, %v396
  %v398 = vrot.slane %v218, %v397
  %v399 = vlaneseq
  %v400 = vshrl.u32 %v399, 7
  %v401 = vsub.s32 2, %v400
  %v402 = vrot.slane %v219, %v401
  %v403 = vlaneseq
  %v404 = vshrl.u32 %v403, 7
  %v405 = vsub.s32 6, %v404
  %v406 = vrot.slane %v219, %v405
  %v407 = vlaneseq
  %v408 = vshrl.u32 %v407, 7
  %v409 = vsub.s32 2, %v408
  %v410 = vrot.slane %v220, %v409
  %v416 = vlaneseq
  %v417 = vshrl.u32 %v416, 7
  %v418 = vsub.s32 2, %v417
  %v419 = vrot.slane %v394, %v418
  %v420 = vlaneseq
  %v421 = vshrl.u32 %v420, 7
  %v422 = vsub.s32 2, %v421
  %v423 = vrot.slane %v398, %v422
  %v424 = vlaneseq
  %v425 = vshrl.u32 %v424, 7
  %v426 = vsub.s32 2, %v425
  %v427 = vrot.slane %v402, %v426
  %v428 = vlaneseq
  %v429 = vshrl.u32 %v428, 7
  %v430 = vsub.s32 2, %v429
  %v431 = vrot.slane %v406, %v430
  %v432 = vlaneseq
  %v433 = vshrl.u32 %v432, 7
  %v434 = vsub.s32 2, %v433
  %v435 = vrot.slane %v410, %v434
  %v436 = vmul.f32 %v389, %v419
  %v437 = vmul.f32 %v389, %v423
  %v438 = vmul.f32 %v389, %v427
  %v439 = vmul.f32 %v389, %v431
  %v440 = vmul.f32 %v389, %v435
  %446 = vrot.lane.b32.xlu0 %v436, 127
  %v447 = vpop.permute.xlu0 %446
  %448 = vrot.lane.b32.xlu0 %v437, 127
  %v449 = vpop.permute.xlu0 %448
  %450 = vrot.lane.b32.xlu0 %v438, 127
  %v451 = vpop.permute.xlu0 %450
  %452 = vrot.lane.b32.xlu0 %v439, 127
  %v453 = vpop.permute.xlu0 %452
  %454 = vrot.lane.b32.xlu0 %v440, 127
  %v455 = vpop.permute.xlu0 %454
  %v456 = vsel %vm293, %v447, %v449
  %v457 = vsel %vm293, %v449, %v451
  %v458 = vsel %vm293, %v451, %v453
  %v459 = vsel %vm293, %v453, %v455
  %v464 = vadd.f32 %v383, %v456
  %v465 = vadd.f32 %v384, %v457
  %v466 = vadd.f32 %v385, %v458
  %v467 = vadd.f32 %v386, %v459
  %468 = vset.pattern.permute.xlu0 7
  %469 = vperm.xlu0 %468, %v20
  %v470 = vpop.permute.xlu0 %469
  %v472 = vlaneseq
  %v473 = vshrl.u32 %v472, 7
  %v474 = vsub.s32 3, %v473
  %v475 = vrot.slane %v218, %v474
  %v476 = vlaneseq
  %v477 = vshrl.u32 %v476, 7
  %v478 = vsub.s32 7, %v477
  %v479 = vrot.slane %v218, %v478
  %v480 = vlaneseq
  %v481 = vshrl.u32 %v480, 7
  %v482 = vsub.s32 3, %v481
  %v483 = vrot.slane %v219, %v482
  %v484 = vlaneseq
  %v485 = vshrl.u32 %v484, 7
  %v486 = vsub.s32 7, %v485
  %v487 = vrot.slane %v219, %v486
  %v488 = vlaneseq
  %v489 = vshrl.u32 %v488, 7
  %v490 = vsub.s32 3, %v489
  %v491 = vrot.slane %v220, %v490
  %v497 = vlaneseq
  %v498 = vshrl.u32 %v497, 7
  %v499 = vsub.s32 3, %v498
  %v500 = vrot.slane %v475, %v499
  %v501 = vlaneseq
  %v502 = vshrl.u32 %v501, 7
  %v503 = vsub.s32 3, %v502
  %v504 = vrot.slane %v479, %v503
  %v505 = vlaneseq
  %v506 = vshrl.u32 %v505, 7
  %v507 = vsub.s32 3, %v506
  %v508 = vrot.slane %v483, %v507
  %v509 = vlaneseq
  %v510 = vshrl.u32 %v509, 7
  %v511 = vsub.s32 3, %v510
  %v512 = vrot.slane %v487, %v511
  %v513 = vlaneseq
  %v514 = vshrl.u32 %v513, 7
  %v515 = vsub.s32 3, %v514
  %v516 = vrot.slane %v491, %v515
  %v517 = vmul.f32 %v470, %v500
  %v518 = vmul.f32 %v470, %v504
  %v519 = vmul.f32 %v470, %v508
  %v520 = vmul.f32 %v470, %v512
  %v521 = vmul.f32 %v470, %v516
  %527 = vrot.lane.b32.xlu0 %v517, 127
  %v528 = vpop.permute.xlu0 %527
  %529 = vrot.lane.b32.xlu0 %v518, 127
  %v530 = vpop.permute.xlu0 %529
  %531 = vrot.lane.b32.xlu0 %v519, 127
  %v532 = vpop.permute.xlu0 %531
  %533 = vrot.lane.b32.xlu0 %v520, 127
  %v534 = vpop.permute.xlu0 %533
  %535 = vrot.lane.b32.xlu0 %v521, 127
  %v536 = vpop.permute.xlu0 %535
  %v537 = vsel %vm293, %v528, %v530
  %v538 = vsel %vm293, %v530, %v532
  %v539 = vsel %vm293, %v532, %v534
  %v540 = vsel %vm293, %v534, %v536
  %v545 = vadd.f32 %v464, %v537
  %v546 = vadd.f32 %v465, %v538
  %v547 = vadd.f32 %v466, %v539
  %v548 = vadd.f32 %v467, %v540
  %549 = vset.pattern.permute.xlu0 8
  %550 = vperm.xlu0 %549, %v20
  %v551 = vpop.permute.xlu0 %550
  %v553 = vmul.f32 %v551, %v256
  %v554 = vmul.f32 %v551, %v260
  %v555 = vmul.f32 %v551, %v264
  %v556 = vmul.f32 %v551, %v268
  %v557 = vmul.f32 %v551, %v272
  %563 = vrot.lane.b32.xlu0 %v553, 126
  %v564 = vpop.permute.xlu0 %563
  %565 = vrot.lane.b32.xlu0 %v554, 126
  %v566 = vpop.permute.xlu0 %565
  %567 = vrot.lane.b32.xlu0 %v555, 126
  %v568 = vpop.permute.xlu0 %567
  %569 = vrot.lane.b32.xlu0 %v556, 126
  %v570 = vpop.permute.xlu0 %569
  %571 = vrot.lane.b32.xlu0 %v557, 126
  %v572 = vpop.permute.xlu0 %571
  %vm573 = vcmask 1031168
  %v574 = vsel %vm573, %v564, %v566
  %v575 = vsel %vm573, %v566, %v568
  %v576 = vsel %vm573, %v568, %v570
  %v577 = vsel %vm573, %v570, %v572
  %v582 = vadd.f32 %v545, %v574
  %v583 = vadd.f32 %v546, %v575
  %v584 = vadd.f32 %v547, %v576
  %v585 = vadd.f32 %v548, %v577
  %586 = vset.pattern.permute.xlu0 9
  %587 = vperm.xlu0 %586, %v20
  %v588 = vpop.permute.xlu0 %587
  %v590 = vmul.f32 %v588, %v338
  %v591 = vmul.f32 %v588, %v342
  %v592 = vmul.f32 %v588, %v346
  %v593 = vmul.f32 %v588, %v350
  %v594 = vmul.f32 %v588, %v354
  %600 = vrot.lane.b32.xlu0 %v590, 126
  %v601 = vpop.permute.xlu0 %600
  %602 = vrot.lane.b32.xlu0 %v591, 126
  %v603 = vpop.permute.xlu0 %602
  %604 = vrot.lane.b32.xlu0 %v592, 126
  %v605 = vpop.permute.xlu0 %604
  %606 = vrot.lane.b32.xlu0 %v593, 126
  %v607 = vpop.permute.xlu0 %606
  %608 = vrot.lane.b32.xlu0 %v594, 126
  %v609 = vpop.permute.xlu0 %608
  %v610 = vsel %vm573, %v601, %v603
  %v611 = vsel %vm573, %v603, %v605
  %v612 = vsel %vm573, %v605, %v607
  %v613 = vsel %vm573, %v607, %v609
  %v618 = vadd.f32 %v582, %v610
  %v619 = vadd.f32 %v583, %v611
  %v620 = vadd.f32 %v584, %v612
  %v621 = vadd.f32 %v585, %v613
  %622 = vset.pattern.permute.xlu0 10
  %623 = vperm.xlu0 %622, %v20
  %v624 = vpop.permute.xlu0 %623
  %v626 = vmul.f32 %v624, %v419
  %v627 = vmul.f32 %v624, %v423
  %v628 = vmul.f32 %v624, %v427
  %v629 = vmul.f32 %v624, %v431
  %v630 = vmul.f32 %v624, %v435
  %636 = vrot.lane.b32.xlu0 %v626, 126
  %v637 = vpop.permute.xlu0 %636
  %638 = vrot.lane.b32.xlu0 %v627, 126
  %v639 = vpop.permute.xlu0 %638
  %640 = vrot.lane.b32.xlu0 %v628, 126
  %v641 = vpop.permute.xlu0 %640
  %642 = vrot.lane.b32.xlu0 %v629, 126
  %v643 = vpop.permute.xlu0 %642
  %644 = vrot.lane.b32.xlu0 %v630, 126
  %v645 = vpop.permute.xlu0 %644
  %v646 = vsel %vm573, %v637, %v639
  %v647 = vsel %vm573, %v639, %v641
  %v648 = vsel %vm573, %v641, %v643
  %v649 = vsel %vm573, %v643, %v645
  %v654 = vadd.f32 %v618, %v646
  %v655 = vadd.f32 %v619, %v647
  %v656 = vadd.f32 %v620, %v648
  %v657 = vadd.f32 %v621, %v649
  %658 = vset.pattern.permute.xlu0 11
  %659 = vperm.xlu0 %658, %v20
  %v660 = vpop.permute.xlu0 %659
  %v662 = vmul.f32 %v660, %v500
  %v663 = vmul.f32 %v660, %v504
  %v664 = vmul.f32 %v660, %v508
  %v665 = vmul.f32 %v660, %v512
  %v666 = vmul.f32 %v660, %v516
  %672 = vrot.lane.b32.xlu0 %v662, 126
  %v673 = vpop.permute.xlu0 %672
  %674 = vrot.lane.b32.xlu0 %v663, 126
  %v675 = vpop.permute.xlu0 %674
  %676 = vrot.lane.b32.xlu0 %v664, 126
  %v677 = vpop.permute.xlu0 %676
  %678 = vrot.lane.b32.xlu0 %v665, 126
  %v679 = vpop.permute.xlu0 %678
  %680 = vrot.lane.b32.xlu0 %v666, 126
  %v681 = vpop.permute.xlu0 %680
  %v682 = vsel %vm573, %v673, %v675
  %v683 = vsel %vm573, %v675, %v677
  %v684 = vsel %vm573, %v677, %v679
  %v685 = vsel %vm573, %v679, %v681
  %v690 = vadd.f32 %v654, %v682
  %v691 = vadd.f32 %v655, %v683
  %v692 = vadd.f32 %v656, %v684
  %v693 = vadd.f32 %v657, %v685
  %694 = vset.pattern.permute.xlu0 12
  %695 = vperm.xlu0 %694, %v20
  %v696 = vpop.permute.xlu0 %695
  %v698 = vmul.f32 %v696, %v256
  %v699 = vmul.f32 %v696, %v260
  %v700 = vmul.f32 %v696, %v264
  %v701 = vmul.f32 %v696, %v268
  %v702 = vmul.f32 %v696, %v272
  %708 = vrot.lane.b32.xlu0 %v698, 112
  %v709 = vpop.permute.xlu0 %708
  %710 = vrot.lane.b32.xlu0 %v699, 112
  %v711 = vpop.permute.xlu0 %710
  %712 = vrot.lane.b32.xlu0 %v700, 112
  %v713 = vpop.permute.xlu0 %712
  %714 = vrot.lane.b32.xlu0 %v701, 112
  %v715 = vpop.permute.xlu0 %714
  %716 = vrot.lane.b32.xlu0 %v702, 112
  %v717 = vpop.permute.xlu0 %716
  %vm718 = vcmask 916480
  %v719 = vsel %vm718, %v709, %v711
  %v720 = vsel %vm718, %v711, %v713
  %v721 = vsel %vm718, %v713, %v715
  %v722 = vsel %vm718, %v715, %v717
  %v727 = vadd.f32 %v690, %v719
  %v728 = vadd.f32 %v691, %v720
  %v729 = vadd.f32 %v692, %v721
  %v730 = vadd.f32 %v693, %v722
  %731 = vset.pattern.permute.xlu0 13
  %732 = vperm.xlu0 %731, %v20
  %v733 = vpop.permute.xlu0 %732
  %v735 = vmul.f32 %v733, %v338
  %v736 = vmul.f32 %v733, %v342
  %v737 = vmul.f32 %v733, %v346
  %v738 = vmul.f32 %v733, %v350
  %v739 = vmul.f32 %v733, %v354
  %745 = vrot.lane.b32.xlu0 %v735, 112
  %v746 = vpop.permute.xlu0 %745
  %747 = vrot.lane.b32.xlu0 %v736, 112
  %v748 = vpop.permute.xlu0 %747
  %749 = vrot.lane.b32.xlu0 %v737, 112
  %v750 = vpop.permute.xlu0 %749
  %751 = vrot.lane.b32.xlu0 %v738, 112
  %v752 = vpop.permute.xlu0 %751
  %753 = vrot.lane.b32.xlu0 %v739, 112
  %v754 = vpop.permute.xlu0 %753
  %v755 = vsel %vm718, %v746, %v748
  %v756 = vsel %vm718, %v748, %v750
  %v757 = vsel %vm718, %v750, %v752
  %v758 = vsel %vm718, %v752, %v754
  %v763 = vadd.f32 %v727, %v755
  %v764 = vadd.f32 %v728, %v756
  %v765 = vadd.f32 %v729, %v757
  %v766 = vadd.f32 %v730, %v758
  %767 = vset.pattern.permute.xlu0 14
  %768 = vperm.xlu0 %767, %v20
  %v769 = vpop.permute.xlu0 %768
  %v771 = vmul.f32 %v769, %v419
  %v772 = vmul.f32 %v769, %v423
  %v773 = vmul.f32 %v769, %v427
  %v774 = vmul.f32 %v769, %v431
  %v775 = vmul.f32 %v769, %v435
  %781 = vrot.lane.b32.xlu0 %v771, 112
  %v782 = vpop.permute.xlu0 %781
  %783 = vrot.lane.b32.xlu0 %v772, 112
  %v784 = vpop.permute.xlu0 %783
  %785 = vrot.lane.b32.xlu0 %v773, 112
  %v786 = vpop.permute.xlu0 %785
  %787 = vrot.lane.b32.xlu0 %v774, 112
  %v788 = vpop.permute.xlu0 %787
  %789 = vrot.lane.b32.xlu0 %v775, 112
  %v790 = vpop.permute.xlu0 %789
  %v791 = vsel %vm718, %v782, %v784
  %v792 = vsel %vm718, %v784, %v786
  %v793 = vsel %vm718, %v786, %v788
  %v794 = vsel %vm718, %v788, %v790
  %v799 = vadd.f32 %v763, %v791
  %v800 = vadd.f32 %v764, %v792
  %v801 = vadd.f32 %v765, %v793
  %v802 = vadd.f32 %v766, %v794
  %803 = vset.pattern.permute.xlu0 15
  %804 = vperm.xlu0 %803, %v20
  %v805 = vpop.permute.xlu0 %804
  %v807 = vmul.f32 %v805, %v500
  %v808 = vmul.f32 %v805, %v504
  %v809 = vmul.f32 %v805, %v508
  %v810 = vmul.f32 %v805, %v512
  %v811 = vmul.f32 %v805, %v516
  %817 = vrot.lane.b32.xlu0 %v807, 112
  %v818 = vpop.permute.xlu0 %817
  %819 = vrot.lane.b32.xlu0 %v808, 112
  %v820 = vpop.permute.xlu0 %819
  %821 = vrot.lane.b32.xlu0 %v809, 112
  %v822 = vpop.permute.xlu0 %821
  %823 = vrot.lane.b32.xlu0 %v810, 112
  %v824 = vpop.permute.xlu0 %823
  %825 = vrot.lane.b32.xlu0 %v811, 112
  %v826 = vpop.permute.xlu0 %825
  %v827 = vsel %vm718, %v818, %v820
  %v828 = vsel %vm718, %v820, %v822
  %v829 = vsel %vm718, %v822, %v824
  %v830 = vsel %vm718, %v824, %v826
  %v835 = vadd.f32 %v799, %v827
  %v836 = vadd.f32 %v800, %v828
  %v837 = vadd.f32 %v801, %v829
  %v838 = vadd.f32 %v802, %v830
  %839 = vset.pattern.permute.xlu0 16
  %840 = vperm.xlu0 %839, %v20
  %v841 = vpop.permute.xlu0 %840
  %v843 = vmul.f32 %v841, %v256
  %v844 = vmul.f32 %v841, %v260
  %v845 = vmul.f32 %v841, %v264
  %v846 = vmul.f32 %v841, %v268
  %v847 = vmul.f32 %v841, %v272
  %853 = vrot.lane.b32.xlu0 %v843, 111
  %v854 = vpop.permute.xlu0 %853
  %855 = vrot.lane.b32.xlu0 %v844, 111
  %v856 = vpop.permute.xlu0 %855
  %857 = vrot.lane.b32.xlu0 %v845, 111
  %v858 = vpop.permute.xlu0 %857
  %859 = vrot.lane.b32.xlu0 %v846, 111
  %v860 = vpop.permute.xlu0 %859
  %861 = vrot.lane.b32.xlu0 %v847, 111
  %v862 = vpop.permute.xlu0 %861
  %vm863 = vcmask 908288
  %v864 = vsel %vm863, %v854, %v856
  %v865 = vsel %vm863, %v856, %v858
  %v866 = vsel %vm863, %v858, %v860
  %v867 = vsel %vm863, %v860, %v862
  %v872 = vadd.f32 %v835, %v864
  %v873 = vadd.f32 %v836, %v865
  %v874 = vadd.f32 %v837, %v866
  %v875 = vadd.f32 %v838, %v867
  %876 = vset.pattern.permute.xlu0 17
  %877 = vperm.xlu0 %876, %v20
  %v878 = vpop.permute.xlu0 %877
  %v880 = vmul.f32 %v878, %v338
  %v881 = vmul.f32 %v878, %v342
  %v882 = vmul.f32 %v878, %v346
  %v883 = vmul.f32 %v878, %v350
  %v884 = vmul.f32 %v878, %v354
  %890 = vrot.lane.b32.xlu0 %v880, 111
  %v891 = vpop.permute.xlu0 %890
  %892 = vrot.lane.b32.xlu0 %v881, 111
  %v893 = vpop.permute.xlu0 %892
  %894 = vrot.lane.b32.xlu0 %v882, 111
  %v895 = vpop.permute.xlu0 %894
  %896 = vrot.lane.b32.xlu0 %v883, 111
  %v897 = vpop.permute.xlu0 %896
  %898 = vrot.lane.b32.xlu0 %v884, 111
  %v899 = vpop.permute.xlu0 %898
  %v900 = vsel %vm863, %v891, %v893
  %v901 = vsel %vm863, %v893, %v895
  %v902 = vsel %vm863, %v895, %v897
  %v903 = vsel %vm863, %v897, %v899
  %v908 = vadd.f32 %v872, %v900
  %v909 = vadd.f32 %v873, %v901
  %v910 = vadd.f32 %v874, %v902
  %v911 = vadd.f32 %v875, %v903
  %912 = vset.pattern.permute.xlu0 18
  %913 = vperm.xlu0 %912, %v20
  %v914 = vpop.permute.xlu0 %913
  %v916 = vmul.f32 %v914, %v419
  %v917 = vmul.f32 %v914, %v423
  %v918 = vmul.f32 %v914, %v427
  %v919 = vmul.f32 %v914, %v431
  %v920 = vmul.f32 %v914, %v435
  %926 = vrot.lane.b32.xlu0 %v916, 111
  %v927 = vpop.permute.xlu0 %926
  %928 = vrot.lane.b32.xlu0 %v917, 111
  %v929 = vpop.permute.xlu0 %928
  %930 = vrot.lane.b32.xlu0 %v918, 111
  %v931 = vpop.permute.xlu0 %930
  %932 = vrot.lane.b32.xlu0 %v919, 111
  %v933 = vpop.permute.xlu0 %932
  %934 = vrot.lane.b32.xlu0 %v920, 111
  %v935 = vpop.permute.xlu0 %934
  %v936 = vsel %vm863, %v927, %v929
  %v937 = vsel %vm863, %v929, %v931
  %v938 = vsel %vm863, %v931, %v933
  %v939 = vsel %vm863, %v933, %v935
  %v944 = vadd.f32 %v908, %v936
  %v945 = vadd.f32 %v909, %v937
  %v946 = vadd.f32 %v910, %v938
  %v947 = vadd.f32 %v911, %v939
  %948 = vset.pattern.permute.xlu0 19
  %949 = vperm.xlu0 %948, %v20
  %v950 = vpop.permute.xlu0 %949
  %v952 = vmul.f32 %v950, %v500
  %v953 = vmul.f32 %v950, %v504
  %v954 = vmul.f32 %v950, %v508
  %v955 = vmul.f32 %v950, %v512
  %v956 = vmul.f32 %v950, %v516
  %962 = vrot.lane.b32.xlu0 %v952, 111
  %v963 = vpop.permute.xlu0 %962
  %964 = vrot.lane.b32.xlu0 %v953, 111
  %v965 = vpop.permute.xlu0 %964
  %966 = vrot.lane.b32.xlu0 %v954, 111
  %v967 = vpop.permute.xlu0 %966
  %968 = vrot.lane.b32.xlu0 %v955, 111
  %v969 = vpop.permute.xlu0 %968
  %970 = vrot.lane.b32.xlu0 %v956, 111
  %v971 = vpop.permute.xlu0 %970
  %v972 = vsel %vm863, %v963, %v965
  %v973 = vsel %vm863, %v965, %v967
  %v974 = vsel %vm863, %v967, %v969
  %v975 = vsel %vm863, %v969, %v971
  %v980 = vadd.f32 %v944, %v972
  %v981 = vadd.f32 %v945, %v973
  %v982 = vadd.f32 %v946, %v974
  %v983 = vadd.f32 %v947, %v975
  %984 = vset.pattern.permute.xlu0 20
  %985 = vperm.xlu0 %984, %v20
  %v986 = vpop.permute.xlu0 %985
  %v988 = vmul.f32 %v986, %v256
  %v989 = vmul.f32 %v986, %v260
  %v990 = vmul.f32 %v986, %v264
  %v991 = vmul.f32 %v986, %v268
  %v992 = vmul.f32 %v986, %v272
  %998 = vrot.lane.b32.xlu0 %v988, 110
  %v999 = vpop.permute.xlu0 %998
  %1000 = vrot.lane.b32.xlu0 %v989, 110
  %v1001 = vpop.permute.xlu0 %1000
  %1002 = vrot.lane.b32.xlu0 %v990, 110
  %v1003 = vpop.permute.xlu0 %1002
  %1004 = vrot.lane.b32.xlu0 %v991, 110
  %v1005 = vpop.permute.xlu0 %1004
  %1006 = vrot.lane.b32.xlu0 %v992, 110
  %v1007 = vpop.permute.xlu0 %1006
  %vm1008 = vcmask 900096
  %v1009 = vsel %vm1008, %v999, %v1001
  %v1010 = vsel %vm1008, %v1001, %v1003
  %v1011 = vsel %vm1008, %v1003, %v1005
  %v1012 = vsel %vm1008, %v1005, %v1007
  %v1017 = vadd.f32 %v980, %v1009
  %v1018 = vadd.f32 %v981, %v1010
  %v1019 = vadd.f32 %v982, %v1011
  %v1020 = vadd.f32 %v983, %v1012
  %1021 = vset.pattern.permute.xlu0 21
  %1022 = vperm.xlu0 %1021, %v20
  %v1023 = vpop.permute.xlu0 %1022
  %v1025 = vmul.f32 %v1023, %v338
  %v1026 = vmul.f32 %v1023, %v342
  %v1027 = vmul.f32 %v1023, %v346
  %v1028 = vmul.f32 %v1023, %v350
  %v1029 = vmul.f32 %v1023, %v354
  %1035 = vrot.lane.b32.xlu0 %v1025, 110
  %v1036 = vpop.permute.xlu0 %1035
  %1037 = vrot.lane.b32.xlu0 %v1026, 110
  %v1038 = vpop.permute.xlu0 %1037
  %1039 = vrot.lane.b32.xlu0 %v1027, 110
  %v1040 = vpop.permute.xlu0 %1039
  %1041 = vrot.lane.b32.xlu0 %v1028, 110
  %v1042 = vpop.permute.xlu0 %1041
  %1043 = vrot.lane.b32.xlu0 %v1029, 110
  %v1044 = vpop.permute.xlu0 %1043
  %v1045 = vsel %vm1008, %v1036, %v1038
  %v1046 = vsel %vm1008, %v1038, %v1040
  %v1047 = vsel %vm1008, %v1040, %v1042
  %v1048 = vsel %vm1008, %v1042, %v1044
  %v1053 = vadd.f32 %v1017, %v1045
  %v1054 = vadd.f32 %v1018, %v1046
  %v1055 = vadd.f32 %v1019, %v1047
  %v1056 = vadd.f32 %v1020, %v1048
  %1057 = vset.pattern.permute.xlu0 22
  %1058 = vperm.xlu0 %1057, %v20
  %v1059 = vpop.permute.xlu0 %1058
  %v1061 = vmul.f32 %v1059, %v419
  %v1062 = vmul.f32 %v1059, %v423
  %v1063 = vmul.f32 %v1059, %v427
  %v1064 = vmul.f32 %v1059, %v431
  %v1065 = vmul.f32 %v1059, %v435
  %1071 = vrot.lane.b32.xlu0 %v1061, 110
  %v1072 = vpop.permute.xlu0 %1071
  %1073 = vrot.lane.b32.xlu0 %v1062, 110
  %v1074 = vpop.permute.xlu0 %1073
  %1075 = vrot.lane.b32.xlu0 %v1063, 110
  %v1076 = vpop.permute.xlu0 %1075
  %1077 = vrot.lane.b32.xlu0 %v1064, 110
  %v1078 = vpop.permute.xlu0 %1077
  %1079 = vrot.lane.b32.xlu0 %v1065, 110
  %v1080 = vpop.permute.xlu0 %1079
  %v1081 = vsel %vm1008, %v1072, %v1074
  %v1082 = vsel %vm1008, %v1074, %v1076
  %v1083 = vsel %vm1008, %v1076, %v1078
  %v1084 = vsel %vm1008, %v1078, %v1080
  %v1089 = vadd.f32 %v1053, %v1081
  %v1090 = vadd.f32 %v1054, %v1082
  %v1091 = vadd.f32 %v1055, %v1083
  %v1092 = vadd.f32 %v1056, %v1084
  %1093 = vset.pattern.permute.xlu0 23
  %1094 = vperm.xlu0 %1093, %v20
  %v1095 = vpop.permute.xlu0 %1094
  %v1097 = vmul.f32 %v1095, %v500
  %v1098 = vmul.f32 %v1095, %v504
  %v1099 = vmul.f32 %v1095, %v508
  %v1100 = vmul.f32 %v1095, %v512
  %v1101 = vmul.f32 %v1095, %v516
  %1107 = vrot.lane.b32.xlu0 %v1097, 110
  %v1108 = vpop.permute.xlu0 %1107
  %1109 = vrot.lane.b32.xlu0 %v1098, 110
  %v1110 = vpop.permute.xlu0 %1109
  %1111 = vrot.lane.b32.xlu0 %v1099, 110
  %v1112 = vpop.permute.xlu0 %1111
  %1113 = vrot.lane.b32.xlu0 %v1100, 110
  %v1114 = vpop.permute.xlu0 %1113
  %1115 = vrot.lane.b32.xlu0 %v1101, 110
  %v1116 = vpop.permute.xlu0 %1115
  %v1117 = vsel %vm1008, %v1108, %v1110
  %v1118 = vsel %vm1008, %v1110, %v1112
  %v1119 = vsel %vm1008, %v1112, %v1114
  %v1120 = vsel %vm1008, %v1114, %v1116
  %v1125 = vadd.f32 %v1089, %v1117
  %v1126 = vadd.f32 %v1090, %v1118
  %v1127 = vadd.f32 %v1091, %v1119
  %v1128 = vadd.f32 %v1092, %v1120
  %1129 = vset.pattern.permute.xlu0 24
  %1130 = vperm.xlu0 %1129, %v20
  %v1131 = vpop.permute.xlu0 %1130
  %v1133 = vmul.f32 %v1131, %v256
  %v1134 = vmul.f32 %v1131, %v260
  %v1135 = vmul.f32 %v1131, %v264
  %v1136 = vmul.f32 %v1131, %v268
  %v1137 = vmul.f32 %v1131, %v272
  %1143 = vrot.lane.b32.xlu0 %v1133, 96
  %v1144 = vpop.permute.xlu0 %1143
  %1145 = vrot.lane.b32.xlu0 %v1134, 96
  %v1146 = vpop.permute.xlu0 %1145
  %1147 = vrot.lane.b32.xlu0 %v1135, 96
  %v1148 = vpop.permute.xlu0 %1147
  %1149 = vrot.lane.b32.xlu0 %v1136, 96
  %v1150 = vpop.permute.xlu0 %1149
  %1151 = vrot.lane.b32.xlu0 %v1137, 96
  %v1152 = vpop.permute.xlu0 %1151
  %vm1153 = vcmask 785408
  %v1154 = vsel %vm1153, %v1144, %v1146
  %v1155 = vsel %vm1153, %v1146, %v1148
  %v1156 = vsel %vm1153, %v1148, %v1150
  %v1157 = vsel %vm1153, %v1150, %v1152
  %v1162 = vadd.f32 %v1125, %v1154
  %v1163 = vadd.f32 %v1126, %v1155
  %v1164 = vadd.f32 %v1127, %v1156
  %v1165 = vadd.f32 %v1128, %v1157
  %1166 = vset.pattern.permute.xlu0 25
  %1167 = vperm.xlu0 %1166, %v20
  %v1168 = vpop.permute.xlu0 %1167
  %v1170 = vmul.f32 %v1168, %v338
  %v1171 = vmul.f32 %v1168, %v342
  %v1172 = vmul.f32 %v1168, %v346
  %v1173 = vmul.f32 %v1168, %v350
  %v1174 = vmul.f32 %v1168, %v354
  %1180 = vrot.lane.b32.xlu0 %v1170, 96
  %v1181 = vpop.permute.xlu0 %1180
  %1182 = vrot.lane.b32.xlu0 %v1171, 96
  %v1183 = vpop.permute.xlu0 %1182
  %1184 = vrot.lane.b32.xlu0 %v1172, 96
  %v1185 = vpop.permute.xlu0 %1184
  %1186 = vrot.lane.b32.xlu0 %v1173, 96
  %v1187 = vpop.permute.xlu0 %1186
  %1188 = vrot.lane.b32.xlu0 %v1174, 96
  %v1189 = vpop.permute.xlu0 %1188
  %v1190 = vsel %vm1153, %v1181, %v1183
  %v1191 = vsel %vm1153, %v1183, %v1185
  %v1192 = vsel %vm1153, %v1185, %v1187
  %v1193 = vsel %vm1153, %v1187, %v1189
  %v1198 = vadd.f32 %v1162, %v1190
  %v1199 = vadd.f32 %v1163, %v1191
  %v1200 = vadd.f32 %v1164, %v1192
  %v1201 = vadd.f32 %v1165, %v1193
  %1202 = vset.pattern.permute.xlu0 26
  %1203 = vperm.xlu0 %1202, %v20
  %v1204 = vpop.permute.xlu0 %1203
  %v1206 = vmul.f32 %v1204, %v419
  %v1207 = vmul.f32 %v1204, %v423
  %v1208 = vmul.f32 %v1204, %v427
  %v1209 = vmul.f32 %v1204, %v431
  %v1210 = vmul.f32 %v1204, %v435
  %1216 = vrot.lane.b32.xlu0 %v1206, 96
  %v1217 = vpop.permute.xlu0 %1216
  %1218 = vrot.lane.b32.xlu0 %v1207, 96
  %v1219 = vpop.permute.xlu0 %1218
  %1220 = vrot.lane.b32.xlu0 %v1208, 96
  %v1221 = vpop.permute.xlu0 %1220
  %1222 = vrot.lane.b32.xlu0 %v1209, 96
  %v1223 = vpop.permute.xlu0 %1222
  %1224 = vrot.lane.b32.xlu0 %v1210, 96
  %v1225 = vpop.permute.xlu0 %1224
  %v1226 = vsel %vm1153, %v1217, %v1219
  %v1227 = vsel %vm1153, %v1219, %v1221
  %v1228 = vsel %vm1153, %v1221, %v1223
  %v1229 = vsel %vm1153, %v1223, %v1225
  %v1234 = vadd.f32 %v1198, %v1226
  %v1235 = vadd.f32 %v1199, %v1227
  %v1236 = vadd.f32 %v1200, %v1228
  %v1237 = vadd.f32 %v1201, %v1229
  %1238 = vset.pattern.permute.xlu0 27
  %1239 = vperm.xlu0 %1238, %v20
  %v1240 = vpop.permute.xlu0 %1239
  %v1242 = vmul.f32 %v1240, %v500
  %v1243 = vmul.f32 %v1240, %v504
  %v1244 = vmul.f32 %v1240, %v508
  %v1245 = vmul.f32 %v1240, %v512
  %v1246 = vmul.f32 %v1240, %v516
  %1252 = vrot.lane.b32.xlu0 %v1242, 96
  %v1253 = vpop.permute.xlu0 %1252
  %1254 = vrot.lane.b32.xlu0 %v1243, 96
  %v1255 = vpop.permute.xlu0 %1254
  %1256 = vrot.lane.b32.xlu0 %v1244, 96
  %v1257 = vpop.permute.xlu0 %1256
  %1258 = vrot.lane.b32.xlu0 %v1245, 96
  %v1259 = vpop.permute.xlu0 %1258
  %1260 = vrot.lane.b32.xlu0 %v1246, 96
  %v1261 = vpop.permute.xlu0 %1260
  %v1262 = vsel %vm1153, %v1253, %v1255
  %v1263 = vsel %vm1153, %v1255, %v1257
  %v1264 = vsel %vm1153, %v1257, %v1259
  %v1265 = vsel %vm1153, %v1259, %v1261
  %v1270 = vadd.f32 %v1234, %v1262
  %v1271 = vadd.f32 %v1235, %v1263
  %v1272 = vadd.f32 %v1236, %v1264
  %v1273 = vadd.f32 %v1237, %v1265
  %1274 = vset.pattern.permute.xlu0 28
  %1275 = vperm.xlu0 %1274, %v20
  %v1276 = vpop.permute.xlu0 %1275
  %v1278 = vmul.f32 %v1276, %v256
  %v1279 = vmul.f32 %v1276, %v260
  %v1280 = vmul.f32 %v1276, %v264
  %v1281 = vmul.f32 %v1276, %v268
  %v1282 = vmul.f32 %v1276, %v272
  %1288 = vrot.lane.b32.xlu0 %v1278, 95
  %v1289 = vpop.permute.xlu0 %1288
  %1290 = vrot.lane.b32.xlu0 %v1279, 95
  %v1291 = vpop.permute.xlu0 %1290
  %1292 = vrot.lane.b32.xlu0 %v1280, 95
  %v1293 = vpop.permute.xlu0 %1292
  %1294 = vrot.lane.b32.xlu0 %v1281, 95
  %v1295 = vpop.permute.xlu0 %1294
  %1296 = vrot.lane.b32.xlu0 %v1282, 95
  %v1297 = vpop.permute.xlu0 %1296
  %vm1298 = vcmask 777216
  %v1299 = vsel %vm1298, %v1289, %v1291
  %v1300 = vsel %vm1298, %v1291, %v1293
  %v1301 = vsel %vm1298, %v1293, %v1295
  %v1302 = vsel %vm1298, %v1295, %v1297
  %v1307 = vadd.f32 %v1270, %v1299
  %v1308 = vadd.f32 %v1271, %v1300
  %v1309 = vadd.f32 %v1272, %v1301
  %v1310 = vadd.f32 %v1273, %v1302
  %1311 = vset.pattern.permute.xlu0 29
  %1312 = vperm.xlu0 %1311, %v20
  %v1313 = vpop.permute.xlu0 %1312
  %v1315 = vmul.f32 %v1313, %v338
  %v1316 = vmul.f32 %v1313, %v342
  %v1317 = vmul.f32 %v1313, %v346
  %v1318 = vmul.f32 %v1313, %v350
  %v1319 = vmul.f32 %v1313, %v354
  %1325 = vrot.lane.b32.xlu0 %v1315, 95
  %v1326 = vpop.permute.xlu0 %1325
  %1327 = vrot.lane.b32.xlu0 %v1316, 95
  %v1328 = vpop.permute.xlu0 %1327
  %1329 = vrot.lane.b32.xlu0 %v1317, 95
  %v1330 = vpop.permute.xlu0 %1329
  %1331 = vrot.lane.b32.xlu0 %v1318, 95
  %v1332 = vpop.permute.xlu0 %1331
  %1333 = vrot.lane.b32.xlu0 %v1319, 95
  %v1334 = vpop.permute.xlu0 %1333
  %v1335 = vsel %vm1298, %v1326, %v1328
  %v1336 = vsel %vm1298, %v1328, %v1330
  %v1337 = vsel %vm1298, %v1330, %v1332
  %v1338 = vsel %vm1298, %v1332, %v1334
  %v1343 = vadd.f32 %v1307, %v1335
  %v1344 = vadd.f32 %v1308, %v1336
  %v1345 = vadd.f32 %v1309, %v1337
  %v1346 = vadd.f32 %v1310, %v1338
  %1347 = vset.pattern.permute.xlu0 30
  %1348 = vperm.xlu0 %1347, %v20
  %v1349 = vpop.permute.xlu0 %1348
  %v1351 = vmul.f32 %v1349, %v419
  %v1352 = vmul.f32 %v1349, %v423
  %v1353 = vmul.f32 %v1349, %v427
  %v1354 = vmul.f32 %v1349, %v431
  %v1355 = vmul.f32 %v1349, %v435
  %1361 = vrot.lane.b32.xlu0 %v1351, 95
  %v1362 = vpop.permute.xlu0 %1361
  %1363 = vrot.lane.b32.xlu0 %v1352, 95
  %v1364 = vpop.permute.xlu0 %1363
  %1365 = vrot.lane.b32.xlu0 %v1353, 95
  %v1366 = vpop.permute.xlu0 %1365
  %1367 = vrot.lane.b32.xlu0 %v1354, 95
  %v1368 = vpop.permute.xlu0 %1367
  %1369 = vrot.lane.b32.xlu0 %v1355, 95
  %v1370 = vpop.permute.xlu0 %1369
  %v1371 = vsel %vm1298, %v1362, %v1364
  %v1372 = vsel %vm1298, %v1364, %v1366
  %v1373 = vsel %vm1298, %v1366, %v1368
  %v1374 = vsel %vm1298, %v1368, %v1370
  %v1379 = vadd.f32 %v1343, %v1371
  %v1380 = vadd.f32 %v1344, %v1372
  %v1381 = vadd.f32 %v1345, %v1373
  %v1382 = vadd.f32 %v1346, %v1374
  %1383 = vset.pattern.permute.xlu0 31
  %1384 = vperm.xlu0 %1383, %v20
  %v1385 = vpop.permute.xlu0 %1384
  %v1387 = vmul.f32 %v1385, %v500
  %v1388 = vmul.f32 %v1385, %v504
  %v1389 = vmul.f32 %v1385, %v508
  %v1390 = vmul.f32 %v1385, %v512
  %v1391 = vmul.f32 %v1385, %v516
  %1397 = vrot.lane.b32.xlu0 %v1387, 95
  %v1398 = vpop.permute.xlu0 %1397
  %1399 = vrot.lane.b32.xlu0 %v1388, 95
  %v1400 = vpop.permute.xlu0 %1399
  %1401 = vrot.lane.b32.xlu0 %v1389, 95
  %v1402 = vpop.permute.xlu0 %1401
  %1403 = vrot.lane.b32.xlu0 %v1390, 95
  %v1404 = vpop.permute.xlu0 %1403
  %1405 = vrot.lane.b32.xlu0 %v1391, 95
  %v1406 = vpop.permute.xlu0 %1405
  %v1407 = vsel %vm1298, %v1398, %v1400
  %v1408 = vsel %vm1298, %v1400, %v1402
  %v1409 = vsel %vm1298, %v1402, %v1404
  %v1410 = vsel %vm1298, %v1404, %v1406
  %v1415 = vadd.f32 %v1379, %v1407
  %v1416 = vadd.f32 %v1380, %v1408
  %v1417 = vadd.f32 %v1381, %v1409
  %v1418 = vadd.f32 %v1382, %v1410
  %1419 = vset.pattern.permute.xlu0 32
  %1420 = vperm.xlu0 %1419, %v20
  %v1421 = vpop.permute.xlu0 %1420
  %v1423 = vmul.f32 %v1421, %v256
  %v1424 = vmul.f32 %v1421, %v260
  %v1425 = vmul.f32 %v1421, %v264
  %v1426 = vmul.f32 %v1421, %v268
  %v1427 = vmul.f32 %v1421, %v272
  %1433 = vrot.lane.b32.xlu0 %v1423, 94
  %v1434 = vpop.permute.xlu0 %1433
  %1435 = vrot.lane.b32.xlu0 %v1424, 94
  %v1436 = vpop.permute.xlu0 %1435
  %1437 = vrot.lane.b32.xlu0 %v1425, 94
  %v1438 = vpop.permute.xlu0 %1437
  %1439 = vrot.lane.b32.xlu0 %v1426, 94
  %v1440 = vpop.permute.xlu0 %1439
  %1441 = vrot.lane.b32.xlu0 %v1427, 94
  %v1442 = vpop.permute.xlu0 %1441
  %vm1443 = vcmask 769024
  %v1444 = vsel %vm1443, %v1434, %v1436
  %v1445 = vsel %vm1443, %v1436, %v1438
  %v1446 = vsel %vm1443, %v1438, %v1440
  %v1447 = vsel %vm1443, %v1440, %v1442
  %v1452 = vadd.f32 %v1415, %v1444
  %v1453 = vadd.f32 %v1416, %v1445
  %v1454 = vadd.f32 %v1417, %v1446
  %v1455 = vadd.f32 %v1418, %v1447
  %1456 = vset.pattern.permute.xlu0 33
  %1457 = vperm.xlu0 %1456, %v20
  %v1458 = vpop.permute.xlu0 %1457
  %v1460 = vmul.f32 %v1458, %v338
  %v1461 = vmul.f32 %v1458, %v342
  %v1462 = vmul.f32 %v1458, %v346
  %v1463 = vmul.f32 %v1458, %v350
  %v1464 = vmul.f32 %v1458, %v354
  %1470 = vrot.lane.b32.xlu0 %v1460, 94
  %v1471 = vpop.permute.xlu0 %1470
  %1472 = vrot.lane.b32.xlu0 %v1461, 94
  %v1473 = vpop.permute.xlu0 %1472
  %1474 = vrot.lane.b32.xlu0 %v1462, 94
  %v1475 = vpop.permute.xlu0 %1474
  %1476 = vrot.lane.b32.xlu0 %v1463, 94
  %v1477 = vpop.permute.xlu0 %1476
  %1478 = vrot.lane.b32.xlu0 %v1464, 94
  %v1479 = vpop.permute.xlu0 %1478
  %v1480 = vsel %vm1443, %v1471, %v1473
  %v1481 = vsel %vm1443, %v1473, %v1475
  %v1482 = vsel %vm1443, %v1475, %v1477
  %v1483 = vsel %vm1443, %v1477, %v1479
  %v1488 = vadd.f32 %v1452, %v1480
  %v1489 = vadd.f32 %v1453, %v1481
  %v1490 = vadd.f32 %v1454, %v1482
  %v1491 = vadd.f32 %v1455, %v1483
  %1492 = vset.pattern.permute.xlu0 34
  %1493 = vperm.xlu0 %1492, %v20
  %v1494 = vpop.permute.xlu0 %1493
  %v1496 = vmul.f32 %v1494, %v419
  %v1497 = vmul.f32 %v1494, %v423
  %v1498 = vmul.f32 %v1494, %v427
  %v1499 = vmul.f32 %v1494, %v431
  %v1500 = vmul.f32 %v1494, %v435
  %1506 = vrot.lane.b32.xlu0 %v1496, 94
  %v1507 = vpop.permute.xlu0 %1506
  %1508 = vrot.lane.b32.xlu0 %v1497, 94
  %v1509 = vpop.permute.xlu0 %1508
  %1510 = vrot.lane.b32.xlu0 %v1498, 94
  %v1511 = vpop.permute.xlu0 %1510
  %1512 = vrot.lane.b32.xlu0 %v1499, 94
  %v1513 = vpop.permute.xlu0 %1512
  %1514 = vrot.lane.b32.xlu0 %v1500, 94
  %v1515 = vpop.permute.xlu0 %1514
  %v1516 = vsel %vm1443, %v1507, %v1509
  %v1517 = vsel %vm1443, %v1509, %v1511
  %v1518 = vsel %vm1443, %v1511, %v1513
  %v1519 = vsel %vm1443, %v1513, %v1515
  %v1524 = vadd.f32 %v1488, %v1516
  %v1525 = vadd.f32 %v1489, %v1517
  %v1526 = vadd.f32 %v1490, %v1518
  %v1527 = vadd.f32 %v1491, %v1519
  %1528 = vset.pattern.permute.xlu0 35
  %1529 = vperm.xlu0 %1528, %v20
  %v1530 = vpop.permute.xlu0 %1529
  %v1532 = vmul.f32 %v1530, %v500
  %v1533 = vmul.f32 %v1530, %v504
  %v1534 = vmul.f32 %v1530, %v508
  %v1535 = vmul.f32 %v1530, %v512
  %v1536 = vmul.f32 %v1530, %v516
  %1542 = vrot.lane.b32.xlu0 %v1532, 94
  %v1543 = vpop.permute.xlu0 %1542
  %1544 = vrot.lane.b32.xlu0 %v1533, 94
  %v1545 = vpop.permute.xlu0 %1544
  %1546 = vrot.lane.b32.xlu0 %v1534, 94
  %v1547 = vpop.permute.xlu0 %1546
  %1548 = vrot.lane.b32.xlu0 %v1535, 94
  %v1549 = vpop.permute.xlu0 %1548
  %1550 = vrot.lane.b32.xlu0 %v1536, 94
  %v1551 = vpop.permute.xlu0 %1550
  %v1552 = vsel %vm1443, %v1543, %v1545
  %v1553 = vsel %vm1443, %v1545, %v1547
  %v1554 = vsel %vm1443, %v1547, %v1549
  %v1555 = vsel %vm1443, %v1549, %v1551
  %v1560 = vadd.f32 %v1524, %v1552
  %v1561 = vadd.f32 %v1525, %v1553
  %v1562 = vadd.f32 %v1526, %v1554
  %v1563 = vadd.f32 %v1527, %v1555
  %v1564 = vld [vmem:[%s2] sm:$0xff]
  %1566 = vset.pattern.permute.xlu0 0
  %1567 = vperm.xlu0 %1566, %v1564
  %v1568 = vpop.permute.xlu0 %1567
  %v1570 = vadd.f32 %v1560, %v1568
  %v1571 = vadd.f32 %v1561, %v1568
  %v1572 = vadd.f32 %v1562, %v1568
  %v1573 = vadd.f32 %v1563, %v1568
  %v1574 = vmax.f32 %v1570, 0.0
  %v1575 = vmax.f32 %v1571, 0.0
  %v1576 = vmax.f32 %v1572, 0.0
  %v1577 = vmax.f32 %v1573, 0.0
  %1578 = vst [vmem:[#allocation2 + $0x20] sm:$0xff] 0.0
  %1579 = vst [vmem:[#allocation2] sm:$0xff] %v1574
  %1580 = vst [vmem:[#allocation2 + $0x8] sm:$0xff] %v1575
  %1581 = vst [vmem:[#allocation2 + $0x10] sm:$0xff] %v1576
  %1582 = vst [vmem:[#allocation2 + $0x18] sm:$0xff] %v1577
  %v1583 = vld [vmem:[#allocation2] sm:$0xff]
  %v1584 = vld [vmem:[#allocation2 + $0x8] sm:$0xff]
  %v1585 = vld [vmem:[#allocation2 + $0x10] sm:$0xff]
  %v1586 = vld [vmem:[#allocation2 + $0x18] sm:$0xff]
  %v1587 = vld [vmem:[#allocation2 + $0x20] sm:$0xff]
  %1593 = vrot.lane.b32.xlu0 %v1583, 127
  %v1594 = vpop.permute.xlu0 %1593
  %1595 = vrot.lane.b32.xlu0 %v1584, 127
  %v1596 = vpop.permute.xlu0 %1595
  %1597 = vrot.lane.b32.xlu0 %v1585, 127
  %v1598 = vpop.permute.xlu0 %1597
  %1599 = vrot.lane.b32.xlu0 %v1586, 127
  %v1600 = vpop.permute.xlu0 %1599
  %1601 = vrot.lane.b32.xlu0 %v1587, 127
  %v1602 = vpop.permute.xlu0 %1601
  %v1603 = vsel %vm293, %v1594, %v1596
  %v1604 = vsel %vm293, %v1596, %v1598
  %v1605 = vsel %vm293, %v1598, %v1600
  %v1606 = vsel %vm293, %v1600, %v1602
  %v1611 = vmax.f32 %v1574, %v1603
  %v1612 = vmax.f32 %v1575, %v1604
  %v1613 = vmax.f32 %v1576, %v1605
  %v1614 = vmax.f32 %v1577, %v1606
  %v1616 = vmax.f32 %v1583, %v1603
  %v1617 = vmax.f32 %v1584, %v1604
  %v1618 = vmax.f32 %v1585, %v1605
  %v1619 = vmax.f32 %v1586, %v1606
  %v1620 = vmax.f32 %v1587, %v1602
  %1626 = vrot.lane.b32.xlu0 %v1616, 112
  %v1627 = vpop.permute.xlu0 %1626
  %1628 = vrot.lane.b32.xlu0 %v1617, 112
  %v1629 = vpop.permute.xlu0 %1628
  %1630 = vrot.lane.b32.xlu0 %v1618, 112
  %v1631 = vpop.permute.xlu0 %1630
  %1632 = vrot.lane.b32.xlu0 %v1619, 112
  %v1633 = vpop.permute.xlu0 %1632
  %1634 = vrot.lane.b32.xlu0 %v1620, 112
  %v1635 = vpop.permute.xlu0 %1634
  %v1636 = vsel %vm718, %v1627, %v1629
  %v1637 = vsel %vm718, %v1629, %v1631
  %v1638 = vsel %vm718, %v1631, %v1633
  %v1639 = vsel %vm718, %v1633, %v1635
  %v1644 = vmax.f32 %v1611, %v1636
  %v1645 = vmax.f32 %v1612, %v1637
  %v1646 = vmax.f32 %v1613, %v1638
  %v1647 = vmax.f32 %v1614, %v1639
  %v1648 = vld [vmem:[%s3] sm:$0xff]
  %v1649 = vld [vmem:[%s3 + $0x8] sm:$0xff]
  %v1650 = vld [vmem:[%s3 + $0x10] sm:$0xff]
  %v1651 = vld [vmem:[%s3 + $0x18] sm:$0xff]
  %v1652 = vld [vmem:[%s3 + $0x20] sm:$0xff]
  %v1653 = vld [vmem:[%s3 + $0x28] sm:$0xff]
  %v1654 = vld [vmem:[%s3 + $0x30] sm:$0xff]
  %v1655 = vld [vmem:[%s3 + $0x38] sm:$0xff]
  %v1656 = vld [vmem:[%s3 + $0x40] sm:$0xff]
  %v1657 = vld [vmem:[%s3 + $0x48] sm:$0xff]
  %v1658 = vld [vmem:[%s3 + $0x50] sm:$0xff]
  %v1659 = vld [vmem:[%s3 + $0x58] sm:$0xff]
  %v1660 = vld [vmem:[%s3 + $0x60] sm:$0xff]
  %v1661 = vld [vmem:[%s3 + $0x68] sm:$0xff]
  %v1662 = vld [vmem:[%s3 + $0x70] sm:$0xff]
  %v1663 = vld [vmem:[%s3 + $0x78] sm:$0xff]
  %v1664 = vld [vmem:[%s3 + $0x80] sm:$0xff]
  %v1665 = vld [vmem:[%s3 + $0x88] sm:$0xff]
  %v1666 = vld [vmem:[%s3 + $0x90] sm:$0xff]
  %v1667 = vld [vmem:[%s3 + $0x98] sm:$0xff]
  %v1668 = vld [vmem:[%s3 + $0xa0] sm:$0xff]
  %v1669 = vld [vmem:[%s3 + $0xa8] sm:$0xff]
  %v1670 = vld [vmem:[%s3 + $0xb0] sm:$0xff]
  %v1671 = vld [vmem:[%s3 + $0xb8] sm:$0xff]
  %v1672 = vld [vmem:[%s3 + $0xc0] sm:$0xff]
  %v1673 = vld [vmem:[%s3 + $0xc8] sm:$0xff]
  %v1674 = vld [vmem:[%s3 + $0xd0] sm:$0xff]
  %v1675 = vld [vmem:[%s3 + $0xd8] sm:$0xff]
  %v1676 = vld [vmem:[%s3 + $0xe0] sm:$0xff]
  %v1677 = vld [vmem:[%s3 + $0xe8] sm:$0xff]
  %v1678 = vld [vmem:[%s3 + $0xf0] sm:$0xff]
  %v1679 = vld [vmem:[%s3 + $0xf8] sm:$0xff]
  %v1680 = vld [vmem:[%s4] sm:$0xff]
  %v1681 = vld [vmem:[%s2] sm:$0xff]
  %1682 = vmatprep.subr.mxu0 0.0
  %1683 = vmatpush1.msra.mxu0 %v1663
  %1684 = vmatprep.subr.mxu0 0.0
  %1685 = vmatpush1.msra.mxu0 %v1662
  %1686 = vmatprep.subr.mxu0 0.0
  %1687 = vmatpush1.msra.mxu0 %v1661
  %1688 = vmatprep.subr.mxu0 0.0
  %1689 = vmatpush1.msra.mxu0 %v1660
  %1690 = vmatprep.subr.mxu0 0.0
  %1691 = vmatpush1.msra.mxu0 %v1659
  %1692 = vmatprep.subr.mxu0 0.0
  %1693 = vmatpush1.msra.mxu0 %v1658
  %1694 = vmatprep.subr.mxu0 0.0
  %1695 = vmatpush1.msra.mxu0 %v1657
  %1696 = vmatprep.subr.mxu0 0.0
  %1697 = vmatpush1.msra.mxu0 %v1656
  %1698 = vmatprep.subr.mxu0 0.0
  %1699 = vmatpush1.msra.mxu0 %v1655
  %1700 = vmatprep.subr.mxu0 0.0
  %1701 = vmatpush1.msra.mxu0 %v1654
  %1702 = vmatprep.subr.mxu0 0.0
  %1703 = vmatpush1.msra.mxu0 %v1653
  %1704 = vmatprep.subr.mxu0 0.0
  %1705 = vmatpush1.msra.mxu0 %v1652
  %1706 = vmatprep.subr.mxu0 0.0
  %1707 = vmatpush1.msra.mxu0 %v1651
  %1708 = vmatprep.subr.mxu0 0.0
  %1709 = vmatpush1.msra.mxu0 %v1650
  %1710 = vmatprep.subr.mxu0 0.0
  %1711 = vmatpush1.msra.mxu0 %v1649
  %1712 = vmatprep.subr.mxu0 0.0
  %1713 = vmatpush1.msra.mxu0 %v1648
  %1714 = vmatprep.subr.mxu0 0.0
  %1715 = vmatpush2.msra.mxu0 %v1679
  %1716 = vmatprep.subr.mxu0 0.0
  %1717 = vmatpush2.msra.mxu0 %v1678
  %1718 = vmatprep.subr.mxu0 0.0
  %1719 = vmatpush2.msra.mxu0 %v1677
  %1720 = vmatprep.subr.mxu0 0.0
  %1721 = vmatpush2.msra.mxu0 %v1676
  %1722 = vmatprep.subr.mxu0 0.0
  %1723 = vmatpush2.msra.mxu0 %v1675
  %1724 = vmatprep.subr.mxu0 0.0
  %1725 = vmatpush2.msra.mxu0 %v1674
  %1726 = vmatprep.subr.mxu0 0.0
  %1727 = vmatpush2.msra.mxu0 %v1673
  %1728 = vmatprep.subr.mxu0 0.0
  %1729 = vmatpush2.msra.mxu0 %v1672
  %1730 = vmatprep.subr.mxu0 0.0
  %1731 = vmatpush2.msra.mxu0 %v1671
  %1732 = vmatprep.subr.mxu0 0.0
  %1733 = vmatpush2.msra.mxu0 %v1670
  %1734 = vmatprep.subr.mxu0 0.0
  %1735 = vmatpush2.msra.mxu0 %v1669
  %1736 = vmatprep.subr.mxu0 0.0
  %1737 = vmatpush2.msra.mxu0 %v1668
  %1738 = vmatprep.subr.mxu0 0.0
  %1739 = vmatpush2.msra.mxu0 %v1667
  %1740 = vmatprep.subr.mxu0 0.0
  %1741 = vmatpush2.msra.mxu0 %v1666
  %1742 = vmatprep.subr.mxu0 0.0
  %1743 = vmatpush2.msra.mxu0 %v1665
  %1744 = vmatprep.subr.mxu0 0.0
  %1745 = vmatpush2.msra.mxu0 %v1664
  %1746 = vmatprep.mubr.f32.mxu0 %v1645
  %1747 = vmatmul.mubr.f32.gmra.mxu0 %v1644
  %v1748 = vpop.f32.mrf.mxu0
  %v1749 = vadd.f32 0.0, %v1748
  %v1750 = vpop.f32.mrf.mxu0
  %1751 = vdwg.mxu0
  %1753 = vset.pattern.permute.xlu0 1
  %1754 = vperm.xlu0 %1753, %v1681
  %v1755 = vpop.permute.xlu0 %1754
  %v1757 = vmul.f32 %v1755, %v1749
  %v1758 = vadd.f32 %v1757, %v1680
  %1759 = vst [vmem:[%s5] sm:$0xff] %v1758
  %1760 = vmatprep.subr.mxu0 0.0
  %1761 = vmatpush1.msra.mxu0 %v1663
  %1762 = vmatprep.subr.mxu0 0.0
  %1763 = vmatpush1.msra.mxu0 %v1662
  %1764 = vmatprep.subr.mxu0 0.0
  %1765 = vmatpush1.msra.mxu0 %v1661
  %1766 = vmatprep.subr.mxu0 0.0
  %1767 = vmatpush1.msra.mxu0 %v1660
  %1768 = vmatprep.subr.mxu0 0.0
  %1769 = vmatpush1.msra.mxu0 %v1659
  %1770 = vmatprep.subr.mxu0 0.0
  %1771 = vmatpush1.msra.mxu0 %v1658
  %1772 = vmatprep.subr.mxu0 0.0
  %1773 = vmatpush1.msra.mxu0 %v1657
  %1774 = vmatprep.subr.mxu0 0.0
  %1775 = vmatpush1.msra.mxu0 %v1656
  %1776 = vmatprep.subr.mxu0 0.0
  %1777 = vmatpush1.msra.mxu0 %v1655
  %1778 = vmatprep.subr.mxu0 0.0
  %1779 = vmatpush1.msra.mxu0 %v1654
  %1780 = vmatprep.subr.mxu0 0.0
  %1781 = vmatpush1.msra.mxu0 %v1653
  %1782 = vmatprep.subr.mxu0 0.0
  %1783 = vmatpush1.msra.mxu0 %v1652
  %1784 = vmatprep.subr.mxu0 0.0
  %1785 = vmatpush1.msra.mxu0 %v1651
  %1786 = vmatprep.subr.mxu0 0.0
  %1787 = vmatpush1.msra.mxu0 %v1650
  %1788 = vmatprep.subr.mxu0 0.0
  %1789 = vmatpush1.msra.mxu0 %v1649
  %1790 = vmatprep.subr.mxu0 0.0
  %1791 = vmatpush1.msra.mxu0 %v1648
  %1792 = vmatprep.subr.mxu0 0.0
  %1793 = vmatpush2.msra.mxu0 %v1679
  %1794 = vmatprep.subr.mxu0 0.0
  %1795 = vmatpush2.msra.mxu0 %v1678
  %1796 = vmatprep.subr.mxu0 0.0
  %1797 = vmatpush2.msra.mxu0 %v1677
  %1798 = vmatprep.subr.mxu0 0.0
  %1799 = vmatpush2.msra.mxu0 %v1676
  %1800 = vmatprep.subr.mxu0 0.0
  %1801 = vmatpush2.msra.mxu0 %v1675
  %1802 = vmatprep.subr.mxu0 0.0
  %1803 = vmatpush2.msra.mxu0 %v1674
  %1804 = vmatprep.subr.mxu0 0.0
  %1805 = vmatpush2.msra.mxu0 %v1673
  %1806 = vmatprep.subr.mxu0 0.0
  %1807 = vmatpush2.msra.mxu0 %v1672
  %1808 = vmatprep.subr.mxu0 0.0
  %1809 = vmatpush2.msra.mxu0 %v1671
  %1810 = vmatprep.subr.mxu0 0.0
  %1811 = vmatpush2.msra.mxu0 %v1670
  %1812 = vmatprep.subr.mxu0 0.0
  %1813 = vmatpush2.msra.mxu0 %v1669
  %1814 = vmatprep.subr.mxu0 0.0
  %1815 = vmatpush2.msra.mxu0 %v1668
  %1816 = vmatprep.subr.mxu0 0.0
  %1817 = vmatpush2.msra.mxu0 %v1667
  %1818 = vmatprep.subr.mxu0 0.0
  %1819 = vmatpush2.msra.mxu0 %v1666
  %1820 = vmatprep.subr.mxu0 0.0
  %1821 = vmatpush2.msra.mxu0 %v1665
  %1822 = vmatprep.subr.mxu0 0.0
  %1823 = vmatpush2.msra.mxu0 %v1664
  %1824 = vmatprep.mubr.f32.mxu0 %v1647
  %1825 = vmatmul.mubr.f32.gmra.mxu0 %v1646
  %v1826 = vpop.f32.mrf.mxu0
  %v1827 = vadd.f32 0.0, %v1826
  %v1828 = vpop.f32.mrf.mxu0
  %1829 = vdwg.mxu0
  %v1830 = vmul.f32 %v1755, %v1827
  %v1831 = vadd.f32 %v1830, %v1680
  %1832 = vst [vmem:[%s5 + $0x8] sm:$0xff] %v1831
  // Predicated region
  $region22: #{model_forward.1} parent=0 // pred_check
    _
  $region23: #{model_forward.1} parent=0 // pred_check_branch
    %1834 = sbr.rel (0) target = $region25
  $region24: #{model_forward.1} parent=0 // pred_region
    _
  $region25: #{model_forward.1} parent=0 // pred_fallthru
    _
  // Predicated region
  $region26: #{model_forward.1} parent=0 // pred_check
    _
  $region27: #{model_forward.1} parent=0 // pred_check_branch
    %1836 = sbr.rel (0) target = $region29
  $region28: #{model_forward.1} parent=0 // pred_region
    _
  $region29: #{model_forward.1} parent=0 // pred_fallthru
    _

</llo_original>
